<compile_context>
chip_gen: v5e
topology: v5e:2x2
jax: 0.10.0
libtpu: 0.0.40
codegen_flags: <defaults>
</compile_context>

<pallas_src>
import numpy as np
import jax
import jax.numpy as jnp
from jax import lax
from jax.experimental import pallas as pl
from jax.experimental.pallas import tpu as pltpu  # noqa: F401  (TPU backend)

# Flip to jnp.bfloat16 on v6e/v7x once batch grows (and loosen the tolerance).
MATMUL_DTYPE = jnp.float32

_C1 = 8  # conv1 out-channels padded 6 -> 8


# ----------------------------------------------------------------------------
# The single fused kernel
# ----------------------------------------------------------------------------
def _lenet_kernel(xq_ref, w1_ref, b1_ref, w2_ref, b2_ref,
                  fw1_ref, fb1_ref, fw2_ref, fb2_ref, fw3_ref, fb3_ref,
                  out_ref):
    """Whole forward pass in one kernel.

    xq_ref : (4, N, 8, 32)  input image rows split by (row mod 4):
             xq[m, n, k, :] = x[n, 4k+m, :].  This makes every conv1 patch a
             contiguous slice inside the kernel.
    w1_ref : (160, 224) block-Toeplitz conv1 weights.
             rows = (kh, iw); cols = (dx, w', c) with c padded to 8.
    w2_ref : (560, 160) block-Toeplitz conv2 weights.
             rows = (kh2, w', c); cols = (jp, b, d).
    fw*_ref: fc weights (fc1 rows permuted CHW->HWC, widths padded to 128).
    """
    N = xq_ref.shape[1]
    f32 = jnp.float32

    # ---- Stage 1: conv1 (5x5, 1->6) + bias + ReLU + 2x2/2 max-pool ---------
    # lhs1 rows = (dy, hp, n, hh)  (conv1 output row oh = 4*hh + 2*hp + dy)
    # lhs1 cols = (kh, iw)
    blocks = []
    for dy in range(2):
        for hp in range(2):
            cols = []
            for kh in range(5):
                r = 2 * hp + dy + kh                     # x row = 4*hh + r
                piece = jnp.concatenate(
                    [xq_ref[r % 4, n, r // 4:r // 4 + 7, :] for n in range(N)],
                    axis=0)                              # (7N, 32)
                cols.append(piece)
            blocks.append(jnp.concatenate(cols, axis=1))  # (7N, 160)
    lhs1 = jnp.concatenate(blocks, axis=0)                # (28N, 160)

    y1 = jnp.dot(lhs1.astype(w1_ref.dtype), w1_ref[...],
                 preferred_element_type=f32)              # (28N, 224)
    y1 = jnp.maximum(y1 + b1_ref[...], 0.0)
    half = 14 * N
    m1 = jnp.maximum(y1[:half, :], y1[half:, :])          # pool over dy (rows)
    p1 = jnp.maximum(m1[:, :14 * _C1], m1[:, 14 * _C1:])  # pool over dx (cols)
    # p1: (14N, 112), rows = (hp, n, hh)  [pool1 row h = 2*hh + hp],
    #                 cols = (w', c)      w' in [0,14), c in [0,8)

    # ---- Stage 2: conv2 (5x5, 6->16) + bias + ReLU + 2x2/2 max-pool --------
    # lhs2 rows = (ip, n, a)   (conv2 output row i = 2a + ip)
    # lhs2 cols = (kh2, w', c); W2big absorbs kw2/j (spatial-in-columns).
    blocks = []
    for ip in range(2):
        cols = []
        for kh2 in range(5):
            rr = ip + kh2                  # pool1 row h = 2a + rr
            q, s = rr % 2, rr // 2         # -> hp = q, hh = a + s
            piece = jnp.concatenate(
                [p1[q * 7 * N + n * 7 + s: q * 7 * N + n * 7 + s + 5, :]
                 for n in range(N)], axis=0)              # (5N, 112)
            cols.append(piece)
        blocks.append(jnp.concatenate(cols, axis=1))      # (5N, 560)
    lhs2 = jnp.concatenate(blocks, axis=0)                # (10N, 560)

    y2 = jnp.dot(lhs2.astype(w2_ref.dtype), w2_ref[...],
                 preferred_element_type=f32)              # (10N, 160)
    y2 = jnp.maximum(y2 + b2_ref[...], 0.0)
    m2 = jnp.maximum(y2[:5 * N, :], y2[5 * N:, :])        # pool over ip (rows)
    p2 = jnp.maximum(m2[:, :80], m2[:, 80:])              # pool over jp (cols)
    # p2: (5N, 80), rows = (n, a), cols = (b, d)

    # ---- Flatten to (N, 400) in (a, b, d) == HWC order ---------------------
    rows = []
    for n in range(N):
        rows.append(jnp.concatenate(
            [p2[n * 5 + a: n * 5 + a + 1, :] for a in range(5)], axis=1))
    feats = jnp.concatenate(rows, axis=0)                 # (N, 400)

    # ---- MLP: fc1+ReLU -> fc2+ReLU -> fc3 (weights VMEM-resident) ----------
    h = jnp.dot(feats.astype(fw1_ref.dtype), fw1_ref[...],
                preferred_element_type=f32)
    h = jnp.maximum(h + fb1_ref[...], 0.0)                # (N, 128)
    h = jnp.dot(h.astype(fw2_ref.dtype), fw2_ref[...],
                preferred_element_type=f32)
    h = jnp.maximum(h + fb2_ref[...], 0.0)                # (N, 128)
    h = jnp.dot(h.astype(fw3_ref.dtype), fw3_ref[...],
                preferred_element_type=f32)
    out_ref[...] = (h + fb3_ref[...]).astype(out_ref.dtype)


# ----------------------------------------------------------------------------
# Wrapper: the only XLA "glue" left is a reshape + transpose of the input.
# ----------------------------------------------------------------------------
def net_forward(x_nchw, p):
    N, C, H, W = x_nchw.shape            # (N, 1, 32, 32); Cin == 1
    x = x_nchw.reshape(N, H, W)
    # Split image rows by (row mod 4): xq[m, n, k, :] = x[n, 4k+m, :]
    xq = x.reshape(N, H // 4, 4, W).transpose(2, 0, 1, 3)   # (4, N, 8, 32)

    flops = 2 * (28 * N * 160 * 224 + 10 * N * 560 * 160
                 + N * 400 * 128 + N * 128 * 128 + N * 128 * 10)
    bytes_accessed = 4 * (4 * N * 8 * 32 + 160 * 224 + 560 * 160
                          + 400 * 128 + 128 * 128 + 128 * 10
                          + 224 + 160 + 128 + 128 + 10 + N * 10)

    return pl.pallas_call(
        _lenet_kernel,
        out_shape=jax.ShapeDtypeStruct((N, 10), jnp.float32),
        cost_estimate=pl.CostEstimate(flops=flops, transcendentals=0,
                                      bytes_accessed=bytes_accessed),
    )(xq, p['w1big'], p['b1big'], p['w2big'], p['b2big'],
      p['fw1p'], p['fb1p'], p['fw2p'], p['fb2p'], p['fw3p'], p['fb3p'])


# ----------------------------------------------------------------------------
# Parameters: torch-like init + one-time prep of the block-Toeplitz matrices
# ----------------------------------------------------------------------------
def init_params(key):
    def unif(k, shape, fan_in):
        bound = 1.0 / np.sqrt(fan_in)
        return jax.random.uniform(k, shape, jnp.float32, -bound, bound)

    ks = jax.random.split(key, 10)
    return dict(
        w1=unif(ks[0], (5, 5, 1, 6), 25),    b1=unif(ks[1], (6,), 25),
        w2=unif(ks[2], (5, 5, 6, 16), 150),  b2=unif(ks[3], (16,), 150),
        fw1=unif(ks[4], (400, 120), 400),    fb1=unif(ks[5], (120,), 400),
        fw2=unif(ks[6], (120, 84), 120),     fb2=unif(ks[7], (84,), 120),
        fw3=unif(ks[8], (84, 10), 84),       fb3=unif(ks[9], (10,), 84),
    )


def prepare_params(p, matmul_dtype=MATMUL_DTYPE):
    """One-time prep (outside the timed forward):

    * conv1 -> W1big[(kh,iw), (dx,w',c)] = w1[kh, iw-(2w'+dx), 0, c]
      (rows = 5 kernel rows x 32 image cols; cols = pool-dx parity, out col,
       out channel padded to 8).  One dot computes all 28x14 pooled positions.
    * conv2 -> W2big[(kh2,w',c), (jp,b,d)] = w2[kh2, w'-(2b+jp), c, d].
    * fc1 rows permuted from torch's CHW flatten to the kernel's HWC order;
      fc widths 120/84 padded to 128 (zero pads stay zero through ReLU).
    """
    w1 = np.asarray(p['w1'], np.float32)
    b1 = np.asarray(p['b1'], np.float32)
    w2 = np.asarray(p['w2'], np.float32)
    b2 = np.asarray(p['b2'], np.float32)
    fw1 = np.asarray(p['fw1'], np.float32)
    fb1 = np.asarray(p['fb1'], np.float32)
    fw2 = np.asarray(p['fw2'], np.float32)
    fb2 = np.asarray(p['fb2'], np.float32)
    fw3 = np.asarray(p['fw3'], np.float32)
    fb3 = np.asarray(p['fb3'], np.float32)

    C1 = _C1
    # ---- conv1 block-Toeplitz weights + bias -------------------------------
    W1big = np.zeros((5 * 32, 2 * 14 * C1), np.float32)
    b1big = np.zeros((2 * 14 * C1,), np.float32)
    for dx in range(2):
        for wq in range(14):
            col = dx * 14 * C1 + wq * C1
            b1big[col:col + 6] = b1
            ow = 2 * wq + dx
            for kh in range(5):
                for kw in range(5):
                    W1big[kh * 32 + ow + kw, col:col + 6] = w1[kh, kw, 0, :]

    # ---- conv2 block-Toeplitz weights + bias -------------------------------
    W2big = np.zeros((5 * 14 * C1, 2 * 5 * 16), np.float32)
    b2big = np.zeros((2 * 5 * 16,), np.float32)
    for jp in range(2):
        for bb in range(5):
            col = jp * 5 * 16 + bb * 16
            b2big[col:col + 16] = b2
            j = 2 * bb + jp
            for kh2 in range(5):
                for kw2 in range(5):
                    row = kh2 * 14 * C1 + (j + kw2) * C1
                    W2big[row:row + 6, col:col + 16] = w2[kh2, kw2, :, :]

    # ---- fc weights: CHW->HWC row permutation + width padding to 128 -------
    perm = np.transpose(np.arange(16 * 5 * 5).reshape(16, 5, 5),
                        (1, 2, 0)).reshape(-1)       # perm[i_hwc] = i_chw
    fw1p = np.zeros((400, 128), np.float32); fw1p[:, :120] = fw1[perm]
    fb1p = np.zeros((128,), np.float32);     fb1p[:120] = fb1
    fw2p = np.zeros((128, 128), np.float32); fw2p[:120, :84] = fw2
    fb2p = np.zeros((128,), np.float32);     fb2p[:84] = fb2
    fw3p = np.zeros((128, 10), np.float32);  fw3p[:84, :] = fw3

    md = matmul_dtype
    return dict(
        w1big=jnp.asarray(W1big, md), b1big=jnp.asarray(b1big[None, :]),
        w2big=jnp.asarray(W2big, md), b2big=jnp.asarray(b2big[None, :]),
        fw1p=jnp.asarray(fw1p, md),   fb1p=jnp.asarray(fb1p[None, :]),
        fw2p=jnp.asarray(fw2p, md),   fb2p=jnp.asarray(fb2p[None, :]),
        fw3p=jnp.asarray(fw3p, md),   fb3p=jnp.asarray(fb3[None, :]),
    )


# ----------------------------------------------------------------------------
# Pure-JAX reference (torch semantics) for the correctness check
# ----------------------------------------------------------------------------
def reference_forward(x_nchw, p):
    hi = jax.lax.Precision.HIGHEST

    def conv(x, w_hwio, b):
        y = lax.conv_general_dilated(
            x, w_hwio, (1, 1), 'VALID',
            dimension_numbers=('NCHW', 'HWIO', 'NCHW'), precision=hi)
        return y + b.reshape(1, -1, 1, 1)

    def pool(x):
        return lax.reduce_window(x, -jnp.inf, lax.max,
                                 (1, 1, 2, 2), (1, 1, 2, 2), 'VALID')

    h = pool(jnp.maximum(conv(x_nchw, p['w1'], p['b1']), 0.0))
    h = pool(jnp.maximum(conv(h, p['w2'], p['b2']), 0.0))
    h = h.reshape(h.shape[0], -1)                   # torch (C, H, W) flatten
    h = jnp.maximum(jnp.dot(h, p['fw1'], precision=hi) + p['fb1'], 0.0)
    h = jnp.maximum(jnp.dot(h, p['fw2'], precision=hi) + p['fb2'], 0.0)
    return jnp.dot(h, p['fw3'], precision=hi) + p['fb3']


if __name__ == "__main__":
    key = jax.random.PRNGKey(0)
    k_x, k_p = jax.random.split(key)
    # fc1 (16*5*5 inputs) implies a 1x32x32 input image; batch = 2.
    x = jax.random.normal(k_x, (2, 1, 32, 32), dtype=jnp.float32)
    params = init_params(k_p)
    run_params = prepare_params(params)      # one-time weight repacking

    fwd = jax.jit(net_forward)
    out = jax.block_until_ready(fwd(x, run_params))

    assert out.shape == (2, 10), out.shape
    ref = np.asarray(reference_forward(x, params))
    # Tightened from 5e-2: catches any layout/permutation bug while leaving
    # margin for MXU f32-pass rounding differences vs. the XLA reference.
    np.testing.assert_allclose(np.asarray(out), ref, rtol=1e-3, atol=1e-3)
    print("KERNEL_OK")
</pallas_src>

<mosaic_0001>
module attributes {stable_mosaic.version = 11 : i64} {
  func.func @_lenet_kernel(%arg0: memref<4x2x8x32xf32, #tpu.memory_space<vmem>>, %arg1: memref<160x224xf32, #tpu.memory_space<vmem>>, %arg2: memref<1x224xf32, #tpu.memory_space<vmem>>, %arg3: memref<560x160xf32, #tpu.memory_space<vmem>>, %arg4: memref<1x160xf32, #tpu.memory_space<vmem>>, %arg5: memref<400x128xf32, #tpu.memory_space<vmem>>, %arg6: memref<1x128xf32, #tpu.memory_space<vmem>>, %arg7: memref<128x128xf32, #tpu.memory_space<vmem>>, %arg8: memref<1x128xf32, #tpu.memory_space<vmem>>, %arg9: memref<128x10xf32, #tpu.memory_space<vmem>>, %arg10: memref<1x10xf32, #tpu.memory_space<vmem>>, %arg11: memref<2x10xf32, #tpu.memory_space<vmem>>) attributes {dimension_semantics = [], scalar_prefetch = 0 : i64, scratch_operands = 0 : i64, tpu.core_type = #tpu.core_type<tc>} {
    %c0 = arith.constant 0 : index
    %c0_0 = arith.constant 0 : index
    %c0_1 = arith.constant 0 : index
    %c0_2 = arith.constant 0 : index
    %0 = vector.load %arg0[%c0, %c0_0, %c0_1, %c0_2] : memref<4x2x8x32xf32, #tpu.memory_space<vmem>>, vector<1x1x7x32xf32>
    %1 = vector.shape_cast %0 : vector<1x1x7x32xf32> to vector<7x32xf32>
    %c0_3 = arith.constant 0 : index
    %c1 = arith.constant 1 : index
    %c0_4 = arith.constant 0 : index
    %c0_5 = arith.constant 0 : index
    %2 = vector.load %arg0[%c0_3, %c1, %c0_4, %c0_5] : memref<4x2x8x32xf32, #tpu.memory_space<vmem>>, vector<1x1x7x32xf32>
    %3 = vector.shape_cast %2 : vector<1x1x7x32xf32> to vector<7x32xf32>
    %4 = tpu.concatenate %1, %3 in 0 : vector<7x32xf32>, vector<7x32xf32> -> vector<14x32xf32>
    %c1_6 = arith.constant 1 : index
    %c0_7 = arith.constant 0 : index
    %c0_8 = arith.constant 0 : index
    %c0_9 = arith.constant 0 : index
    %5 = vector.load %arg0[%c1_6, %c0_7, %c0_8, %c0_9] : memref<4x2x8x32xf32, #tpu.memory_space<vmem>>, vector<1x1x7x32xf32>
    %6 = vector.shape_cast %5 : vector<1x1x7x32xf32> to vector<7x32xf32>
    %c1_10 = arith.constant 1 : index
    %c1_11 = arith.constant 1 : index
    %c0_12 = arith.constant 0 : index
    %c0_13 = arith.constant 0 : index
    %7 = vector.load %arg0[%c1_10, %c1_11, %c0_12, %c0_13] : memref<4x2x8x32xf32, #tpu.memory_space<vmem>>, vector<1x1x7x32xf32>
    %8 = vector.shape_cast %7 : vector<1x1x7x32xf32> to vector<7x32xf32>
    %9 = tpu.concatenate %6, %8 in 0 : vector<7x32xf32>, vector<7x32xf32> -> vector<14x32xf32>
    %c2 = arith.constant 2 : index
    %c0_14 = arith.constant 0 : index
    %c0_15 = arith.constant 0 : index
    %c0_16 = arith.constant 0 : index
    %10 = vector.load %arg0[%c2, %c0_14, %c0_15, %c0_16] : memref<4x2x8x32xf32, #tpu.memory_space<vmem>>, vector<1x1x7x32xf32>
    %11 = vector.shape_cast %10 : vector<1x1x7x32xf32> to vector<7x32xf32>
    %c2_17 = arith.constant 2 : index
    %c1_18 = arith.constant 1 : index
    %c0_19 = arith.constant 0 : index
    %c0_20 = arith.constant 0 : index
    %12 = vector.load %arg0[%c2_17, %c1_18, %c0_19, %c0_20] : memref<4x2x8x32xf32, #tpu.memory_space<vmem>>, vector<1x1x7x32xf32>
    %13 = vector.shape_cast %12 : vector<1x1x7x32xf32> to vector<7x32xf32>
    %14 = tpu.concatenate %11, %13 in 0 : vector<7x32xf32>, vector<7x32xf32> -> vector<14x32xf32>
    %c3 = arith.constant 3 : index
    %c0_21 = arith.constant 0 : index
    %c0_22 = arith.constant 0 : index
    %c0_23 = arith.constant 0 : index
    %15 = vector.load %arg0[%c3, %c0_21, %c0_22, %c0_23] : memref<4x2x8x32xf32, #tpu.memory_space<vmem>>, vector<1x1x7x32xf32>
    %16 = vector.shape_cast %15 : vector<1x1x7x32xf32> to vector<7x32xf32>
    %c3_24 = arith.constant 3 : index
    %c1_25 = arith.constant 1 : index
    %c0_26 = arith.constant 0 : index
    %c0_27 = arith.constant 0 : index
    %17 = vector.load %arg0[%c3_24, %c1_25, %c0_26, %c0_27] : memref<4x2x8x32xf32, #tpu.memory_space<vmem>>, vector<1x1x7x32xf32>
    %18 = vector.shape_cast %17 : vector<1x1x7x32xf32> to vector<7x32xf32>
    %19 = tpu.concatenate %16, %18 in 0 : vector<7x32xf32>, vector<7x32xf32> -> vector<14x32xf32>
    %c0_28 = arith.constant 0 : index
    %c0_29 = arith.constant 0 : index
    %c1_30 = arith.constant 1 : index
    %c0_31 = arith.constant 0 : index
    %20 = vector.load %arg0[%c0_28, %c0_29, %c1_30, %c0_31] : memref<4x2x8x32xf32, #tpu.memory_space<vmem>>, vector<1x1x7x32xf32>
    %21 = vector.shape_cast %20 : vector<1x1x7x32xf32> to vector<7x32xf32>
    %c0_32 = arith.constant 0 : index
    %c1_33 = arith.constant 1 : index
    %c1_34 = arith.constant 1 : index
    %c0_35 = arith.constant 0 : index
    %22 = vector.load %arg0[%c0_32, %c1_33, %c1_34, %c0_35] : memref<4x2x8x32xf32, #tpu.memory_space<vmem>>, vector<1x1x7x32xf32>
    %23 = vector.shape_cast %22 : vector<1x1x7x32xf32> to vector<7x32xf32>
    %24 = tpu.concatenate %21, %23 in 0 : vector<7x32xf32>, vector<7x32xf32> -> vector<14x32xf32>
    %25 = tpu.concatenate %4, %9, %14, %19, %24 in 1 : vector<14x32xf32>, vector<14x32xf32>, vector<14x32xf32>, vector<14x32xf32>, vector<14x32xf32> -> vector<14x160xf32>
    %c2_36 = arith.constant 2 : index
    %c0_37 = arith.constant 0 : index
    %c0_38 = arith.constant 0 : index
    %c0_39 = arith.constant 0 : index
    %26 = vector.load %arg0[%c2_36, %c0_37, %c0_38, %c0_39] : memref<4x2x8x32xf32, #tpu.memory_space<vmem>>, vector<1x1x7x32xf32>
    %27 = vector.shape_cast %26 : vector<1x1x7x32xf32> to vector<7x32xf32>
    %c2_40 = arith.constant 2 : index
    %c1_41 = arith.constant 1 : index
    %c0_42 = arith.constant 0 : index
    %c0_43 = arith.constant 0 : index
    %28 = vector.load %arg0[%c2_40, %c1_41, %c0_42, %c0_43] : memref<4x2x8x32xf32, #tpu.memory_space<vmem>>, vector<1x1x7x32xf32>
    %29 = vector.shape_cast %28 : vector<1x1x7x32xf32> to vector<7x32xf32>
    %30 = tpu.concatenate %27, %29 in 0 : vector<7x32xf32>, vector<7x32xf32> -> vector<14x32xf32>
    %c3_44 = arith.constant 3 : index
    %c0_45 = arith.constant 0 : index
    %c0_46 = arith.constant 0 : index
    %c0_47 = arith.constant 0 : index
    %31 = vector.load %arg0[%c3_44, %c0_45, %c0_46, %c0_47] : memref<4x2x8x32xf32, #tpu.memory_space<vmem>>, vector<1x1x7x32xf32>
    %32 = vector.shape_cast %31 : vector<1x1x7x32xf32> to vector<7x32xf32>
    %c3_48 = arith.constant 3 : index
    %c1_49 = arith.constant 1 : index
    %c0_50 = arith.constant 0 : index
    %c0_51 = arith.constant 0 : index
    %33 = vector.load %arg0[%c3_48, %c1_49, %c0_50, %c0_51] : memref<4x2x8x32xf32, #tpu.memory_space<vmem>>, vector<1x1x7x32xf32>
    %34 = vector.shape_cast %33 : vector<1x1x7x32xf32> to vector<7x32xf32>
    %35 = tpu.concatenate %32, %34 in 0 : vector<7x32xf32>, vector<7x32xf32> -> vector<14x32xf32>
    %c0_52 = arith.constant 0 : index
    %c0_53 = arith.constant 0 : index
    %c1_54 = arith.constant 1 : index
    %c0_55 = arith.constant 0 : index
    %36 = vector.load %arg0[%c0_52, %c0_53, %c1_54, %c0_55] : memref<4x2x8x32xf32, #tpu.memory_space<vmem>>, vector<1x1x7x32xf32>
    %37 = vector.shape_cast %36 : vector<1x1x7x32xf32> to vector<7x32xf32>
    %c0_56 = arith.constant 0 : index
    %c1_57 = arith.constant 1 : index
    %c1_58 = arith.constant 1 : index
    %c0_59 = arith.constant 0 : index
    %38 = vector.load %arg0[%c0_56, %c1_57, %c1_58, %c0_59] : memref<4x2x8x32xf32, #tpu.memory_space<vmem>>, vector<1x1x7x32xf32>
    %39 = vector.shape_cast %38 : vector<1x1x7x32xf32> to vector<7x32xf32>
    %40 = tpu.concatenate %37, %39 in 0 : vector<7x32xf32>, vector<7x32xf32> -> vector<14x32xf32>
    %c1_60 = arith.constant 1 : index
    %c0_61 = arith.constant 0 : index
    %c1_62 = arith.constant 1 : index
    %c0_63 = arith.constant 0 : index
    %41 = vector.load %arg0[%c1_60, %c0_61, %c1_62, %c0_63] : memref<4x2x8x32xf32, #tpu.memory_space<vmem>>, vector<1x1x7x32xf32>
    %42 = vector.shape_cast %41 : vector<1x1x7x32xf32> to vector<7x32xf32>
    %c1_64 = arith.constant 1 : index
    %c1_65 = arith.constant 1 : index
    %c1_66 = arith.constant 1 : index
    %c0_67 = arith.constant 0 : index
    %43 = vector.load %arg0[%c1_64, %c1_65, %c1_66, %c0_67] : memref<4x2x8x32xf32, #tpu.memory_space<vmem>>, vector<1x1x7x32xf32>
    %44 = vector.shape_cast %43 : vector<1x1x7x32xf32> to vector<7x32xf32>
    %45 = tpu.concatenate %42, %44 in 0 : vector<7x32xf32>, vector<7x32xf32> -> vector<14x32xf32>
    %c2_68 = arith.constant 2 : index
    %c0_69 = arith.constant 0 : index
    %c1_70 = arith.constant 1 : index
    %c0_71 = arith.constant 0 : index
    %46 = vector.load %arg0[%c2_68, %c0_69, %c1_70, %c0_71] : memref<4x2x8x32xf32, #tpu.memory_space<vmem>>, vector<1x1x7x32xf32>
    %47 = vector.shape_cast %46 : vector<1x1x7x32xf32> to vector<7x32xf32>
    %c2_72 = arith.constant 2 : index
    %c1_73 = arith.constant 1 : index
    %c1_74 = arith.constant 1 : index
    %c0_75 = arith.constant 0 : index
    %48 = vector.load %arg0[%c2_72, %c1_73, %c1_74, %c0_75] : memref<4x2x8x32xf32, #tpu.memory_space<vmem>>, vector<1x1x7x32xf32>
    %49 = vector.shape_cast %48 : vector<1x1x7x32xf32> to vector<7x32xf32>
    %50 = tpu.concatenate %47, %49 in 0 : vector<7x32xf32>, vector<7x32xf32> -> vector<14x32xf32>
    %51 = tpu.concatenate %30, %35, %40, %45, %50 in 1 : vector<14x32xf32>, vector<14x32xf32>, vector<14x32xf32>, vector<14x32xf32>, vector<14x32xf32> -> vector<14x160xf32>
    %c1_76 = arith.constant 1 : index
    %c0_77 = arith.constant 0 : index
    %c0_78 = arith.constant 0 : index
    %c0_79 = arith.constant 0 : index
    %52 = vector.load %arg0[%c1_76, %c0_77, %c0_78, %c0_79] : memref<4x2x8x32xf32, #tpu.memory_space<vmem>>, vector<1x1x7x32xf32>
    %53 = vector.shape_cast %52 : vector<1x1x7x32xf32> to vector<7x32xf32>
    %c1_80 = arith.constant 1 : index
    %c1_81 = arith.constant 1 : index
    %c0_82 = arith.constant 0 : index
    %c0_83 = arith.constant 0 : index
    %54 = vector.load %arg0[%c1_80, %c1_81, %c0_82, %c0_83] : memref<4x2x8x32xf32, #tpu.memory_space<vmem>>, vector<1x1x7x32xf32>
    %55 = vector.shape_cast %54 : vector<1x1x7x32xf32> to vector<7x32xf32>
    %56 = tpu.concatenate %53, %55 in 0 : vector<7x32xf32>, vector<7x32xf32> -> vector<14x32xf32>
    %c2_84 = arith.constant 2 : index
    %c0_85 = arith.constant 0 : index
    %c0_86 = arith.constant 0 : index
    %c0_87 = arith.constant 0 : index
    %57 = vector.load %arg0[%c2_84, %c0_85, %c0_86, %c0_87] : memref<4x2x8x32xf32, #tpu.memory_space<vmem>>, vector<1x1x7x32xf32>
    %58 = vector.shape_cast %57 : vector<1x1x7x32xf32> to vector<7x32xf32>
    %c2_88 = arith.constant 2 : index
    %c1_89 = arith.constant 1 : index
    %c0_90 = arith.constant 0 : index
    %c0_91 = arith.constant 0 : index
    %59 = vector.load %arg0[%c2_88, %c1_89, %c0_90, %c0_91] : memref<4x2x8x32xf32, #tpu.memory_space<vmem>>, vector<1x1x7x32xf32>
    %60 = vector.shape_cast %59 : vector<1x1x7x32xf32> to vector<7x32xf32>
    %61 = tpu.concatenate %58, %60 in 0 : vector<7x32xf32>, vector<7x32xf32> -> vector<14x32xf32>
    %c3_92 = arith.constant 3 : index
    %c0_93 = arith.constant 0 : index
    %c0_94 = arith.constant 0 : index
    %c0_95 = arith.constant 0 : index
    %62 = vector.load %arg0[%c3_92, %c0_93, %c0_94, %c0_95] : memref<4x2x8x32xf32, #tpu.memory_space<vmem>>, vector<1x1x7x32xf32>
    %63 = vector.shape_cast %62 : vector<1x1x7x32xf32> to vector<7x32xf32>
    %c3_96 = arith.constant 3 : index
    %c1_97 = arith.constant 1 : index
    %c0_98 = arith.constant 0 : index
    %c0_99 = arith.constant 0 : index
    %64 = vector.load %arg0[%c3_96, %c1_97, %c0_98, %c0_99] : memref<4x2x8x32xf32, #tpu.memory_space<vmem>>, vector<1x1x7x32xf32>
    %65 = vector.shape_cast %64 : vector<1x1x7x32xf32> to vector<7x32xf32>
    %66 = tpu.concatenate %63, %65 in 0 : vector<7x32xf32>, vector<7x32xf32> -> vector<14x32xf32>
    %c0_100 = arith.constant 0 : index
    %c0_101 = arith.constant 0 : index
    %c1_102 = arith.constant 1 : index
    %c0_103 = arith.constant 0 : index
    %67 = vector.load %arg0[%c0_100, %c0_101, %c1_102, %c0_103] : memref<4x2x8x32xf32, #tpu.memory_space<vmem>>, vector<1x1x7x32xf32>
    %68 = vector.shape_cast %67 : vector<1x1x7x32xf32> to vector<7x32xf32>
    %c0_104 = arith.constant 0 : index
    %c1_105 = arith.constant 1 : index
    %c1_106 = arith.constant 1 : index
    %c0_107 = arith.constant 0 : index
    %69 = vector.load %arg0[%c0_104, %c1_105, %c1_106, %c0_107] : memref<4x2x8x32xf32, #tpu.memory_space<vmem>>, vector<1x1x7x32xf32>
    %70 = vector.shape_cast %69 : vector<1x1x7x32xf32> to vector<7x32xf32>
    %71 = tpu.concatenate %68, %70 in 0 : vector<7x32xf32>, vector<7x32xf32> -> vector<14x32xf32>
    %c1_108 = arith.constant 1 : index
    %c0_109 = arith.constant 0 : index
    %c1_110 = arith.constant 1 : index
    %c0_111 = arith.constant 0 : index
    %72 = vector.load %arg0[%c1_108, %c0_109, %c1_110, %c0_111] : memref<4x2x8x32xf32, #tpu.memory_space<vmem>>, vector<1x1x7x32xf32>
    %73 = vector.shape_cast %72 : vector<1x1x7x32xf32> to vector<7x32xf32>
    %c1_112 = arith.constant 1 : index
    %c1_113 = arith.constant 1 : index
    %c1_114 = arith.constant 1 : index
    %c0_115 = arith.constant 0 : index
    %74 = vector.load %arg0[%c1_112, %c1_113, %c1_114, %c0_115] : memref<4x2x8x32xf32, #tpu.memory_space<vmem>>, vector<1x1x7x32xf32>
    %75 = vector.shape_cast %74 : vector<1x1x7x32xf32> to vector<7x32xf32>
    %76 = tpu.concatenate %73, %75 in 0 : vector<7x32xf32>, vector<7x32xf32> -> vector<14x32xf32>
    %77 = tpu.concatenate %56, %61, %66, %71, %76 in 1 : vector<14x32xf32>, vector<14x32xf32>, vector<14x32xf32>, vector<14x32xf32>, vector<14x32xf32> -> vector<14x160xf32>
    %c3_116 = arith.constant 3 : index
    %c0_117 = arith.constant 0 : index
    %c0_118 = arith.constant 0 : index
    %c0_119 = arith.constant 0 : index
    %78 = vector.load %arg0[%c3_116, %c0_117, %c0_118, %c0_119] : memref<4x2x8x32xf32, #tpu.memory_space<vmem>>, vector<1x1x7x32xf32>
    %79 = vector.shape_cast %78 : vector<1x1x7x32xf32> to vector<7x32xf32>
    %c3_120 = arith.constant 3 : index
    %c1_121 = arith.constant 1 : index
    %c0_122 = arith.constant 0 : index
    %c0_123 = arith.constant 0 : index
    %80 = vector.load %arg0[%c3_120, %c1_121, %c0_122, %c0_123] : memref<4x2x8x32xf32, #tpu.memory_space<vmem>>, vector<1x1x7x32xf32>
    %81 = vector.shape_cast %80 : vector<1x1x7x32xf32> to vector<7x32xf32>
    %82 = tpu.concatenate %79, %81 in 0 : vector<7x32xf32>, vector<7x32xf32> -> vector<14x32xf32>
    %c0_124 = arith.constant 0 : index
    %c0_125 = arith.constant 0 : index
    %c1_126 = arith.constant 1 : index
    %c0_127 = arith.constant 0 : index
    %83 = vector.load %arg0[%c0_124, %c0_125, %c1_126, %c0_127] : memref<4x2x8x32xf32, #tpu.memory_space<vmem>>, vector<1x1x7x32xf32>
    %84 = vector.shape_cast %83 : vector<1x1x7x32xf32> to vector<7x32xf32>
    %c0_128 = arith.constant 0 : index
    %c1_129 = arith.constant 1 : index
    %c1_130 = arith.constant 1 : index
    %c0_131 = arith.constant 0 : index
    %85 = vector.load %arg0[%c0_128, %c1_129, %c1_130, %c0_131] : memref<4x2x8x32xf32, #tpu.memory_space<vmem>>, vector<1x1x7x32xf32>
    %86 = vector.shape_cast %85 : vector<1x1x7x32xf32> to vector<7x32xf32>
    %87 = tpu.concatenate %84, %86 in 0 : vector<7x32xf32>, vector<7x32xf32> -> vector<14x32xf32>
    %c1_132 = arith.constant 1 : index
    %c0_133 = arith.constant 0 : index
    %c1_134 = arith.constant 1 : index
    %c0_135 = arith.constant 0 : index
    %88 = vector.load %arg0[%c1_132, %c0_133, %c1_134, %c0_135] : memref<4x2x8x32xf32, #tpu.memory_space<vmem>>, vector<1x1x7x32xf32>
    %89 = vector.shape_cast %88 : vector<1x1x7x32xf32> to vector<7x32xf32>
    %c1_136 = arith.constant 1 : index
    %c1_137 = arith.constant 1 : index
    %c1_138 = arith.constant 1 : index
    %c0_139 = arith.constant 0 : index
    %90 = vector.load %arg0[%c1_136, %c1_137, %c1_138, %c0_139] : memref<4x2x8x32xf32, #tpu.memory_space<vmem>>, vector<1x1x7x32xf32>
    %91 = vector.shape_cast %90 : vector<1x1x7x32xf32> to vector<7x32xf32>
    %92 = tpu.concatenate %89, %91 in 0 : vector<7x32xf32>, vector<7x32xf32> -> vector<14x32xf32>
    %c2_140 = arith.constant 2 : index
    %c0_141 = arith.constant 0 : index
    %c1_142 = arith.constant 1 : index
    %c0_143 = arith.constant 0 : index
    %93 = vector.load %arg0[%c2_140, %c0_141, %c1_142, %c0_143] : memref<4x2x8x32xf32, #tpu.memory_space<vmem>>, vector<1x1x7x32xf32>
    %94 = vector.shape_cast %93 : vector<1x1x7x32xf32> to vector<7x32xf32>
    %c2_144 = arith.constant 2 : index
    %c1_145 = arith.constant 1 : index
    %c1_146 = arith.constant 1 : index
    %c0_147 = arith.constant 0 : index
    %95 = vector.load %arg0[%c2_144, %c1_145, %c1_146, %c0_147] : memref<4x2x8x32xf32, #tpu.memory_space<vmem>>, vector<1x1x7x32xf32>
    %96 = vector.shape_cast %95 : vector<1x1x7x32xf32> to vector<7x32xf32>
    %97 = tpu.concatenate %94, %96 in 0 : vector<7x32xf32>, vector<7x32xf32> -> vector<14x32xf32>
    %c3_148 = arith.constant 3 : index
    %c0_149 = arith.constant 0 : index
    %c1_150 = arith.constant 1 : index
    %c0_151 = arith.constant 0 : index
    %98 = vector.load %arg0[%c3_148, %c0_149, %c1_150, %c0_151] : memref<4x2x8x32xf32, #tpu.memory_space<vmem>>, vector<1x1x7x32xf32>
    %99 = vector.shape_cast %98 : vector<1x1x7x32xf32> to vector<7x32xf32>
    %c3_152 = arith.constant 3 : index
    %c1_153 = arith.constant 1 : index
    %c1_154 = arith.constant 1 : index
    %c0_155 = arith.constant 0 : index
    %100 = vector.load %arg0[%c3_152, %c1_153, %c1_154, %c0_155] : memref<4x2x8x32xf32, #tpu.memory_space<vmem>>, vector<1x1x7x32xf32>
    %101 = vector.shape_cast %100 : vector<1x1x7x32xf32> to vector<7x32xf32>
    %102 = tpu.concatenate %99, %101 in 0 : vector<7x32xf32>, vector<7x32xf32> -> vector<14x32xf32>
    %103 = tpu.concatenate %82, %87, %92, %97, %102 in 1 : vector<14x32xf32>, vector<14x32xf32>, vector<14x32xf32>, vector<14x32xf32>, vector<14x32xf32> -> vector<14x160xf32>
    %104 = tpu.concatenate %25, %51, %77, %103 in 0 : vector<14x160xf32>, vector<14x160xf32>, vector<14x160xf32>, vector<14x160xf32> -> vector<56x160xf32>
    %c0_156 = arith.constant 0 : index
    %c0_157 = arith.constant 0 : index
    %105 = vector.load %arg1[%c0_156, %c0_157] : memref<160x224xf32, #tpu.memory_space<vmem>>, vector<160x224xf32>
    %cst = arith.constant dense<0.000000e+00> : vector<56x224xf32>
    %106 = tpu.matmul %104, %105, %cst {dimension_numbers = #tpu.dot_dimension_numbers<[1], [0], [0], [1], [0, 0, 1, 1], [], []>} : vector<56x160xf32>, vector<160x224xf32>, vector<56x224xf32> -> vector<56x224xf32>
    %c0_158 = arith.constant 0 : index
    %c0_159 = arith.constant 0 : index
    %107 = vector.load %arg2[%c0_158, %c0_159] : memref<1x224xf32, #tpu.memory_space<vmem>>, vector<1x224xf32>
    %108 = vector.broadcast %107 : vector<1x224xf32> to vector<56x224xf32>
    %109 = arith.addf %106, %108 : vector<56x224xf32>
    %cst_160 = arith.constant 0.000000e+00 : f32
    %110 = vector.broadcast %cst_160 : f32 to vector<56x224xf32>
    %111 = arith.maximumf %109, %110 : vector<56x224xf32>
    %112 = vector.extract_strided_slice %111 {offsets = [0, 0], sizes = [28, 224], strides = [1, 1]} : vector<56x224xf32> to vector<28x224xf32>
    %113 = vector.extract_strided_slice %111 {offsets = [28, 0], sizes = [28, 224], strides = [1, 1]} : vector<56x224xf32> to vector<28x224xf32>
    %114 = arith.maximumf %112, %113 : vector<28x224xf32>
    %115 = vector.extract_strided_slice %114 {offsets = [0, 0], sizes = [28, 112], strides = [1, 1]} : vector<28x224xf32> to vector<28x112xf32>
    %116 = vector.extract_strided_slice %114 {offsets = [0, 112], sizes = [28, 112], strides = [1, 1]} : vector<28x224xf32> to vector<28x112xf32>
    %117 = arith.maximumf %115, %116 : vector<28x112xf32>
    %118 = vector.extract_strided_slice %117 {offsets = [0, 0], sizes = [5, 112], strides = [1, 1]} : vector<28x112xf32> to vector<5x112xf32>
    %119 = vector.extract_strided_slice %117 {offsets = [7, 0], sizes = [5, 112], strides = [1, 1]} : vector<28x112xf32> to vector<5x112xf32>
    %120 = tpu.concatenate %118, %119 in 0 : vector<5x112xf32>, vector<5x112xf32> -> vector<10x112xf32>
    %121 = vector.extract_strided_slice %117 {offsets = [14, 0], sizes = [5, 112], strides = [1, 1]} : vector<28x112xf32> to vector<5x112xf32>
    %122 = vector.extract_strided_slice %117 {offsets = [21, 0], sizes = [5, 112], strides = [1, 1]} : vector<28x112xf32> to vector<5x112xf32>
    %123 = tpu.concatenate %121, %122 in 0 : vector<5x112xf32>, vector<5x112xf32> -> vector<10x112xf32>
    %124 = vector.extract_strided_slice %117 {offsets = [1, 0], sizes = [5, 112], strides = [1, 1]} : vector<28x112xf32> to vector<5x112xf32>
    %125 = vector.extract_strided_slice %117 {offsets = [8, 0], sizes = [5, 112], strides = [1, 1]} : vector<28x112xf32> to vector<5x112xf32>
    %126 = tpu.concatenate %124, %125 in 0 : vector<5x112xf32>, vector<5x112xf32> -> vector<10x112xf32>
    %127 = vector.extract_strided_slice %117 {offsets = [15, 0], sizes = [5, 112], strides = [1, 1]} : vector<28x112xf32> to vector<5x112xf32>
    %128 = vector.extract_strided_slice %117 {offsets = [22, 0], sizes = [5, 112], strides = [1, 1]} : vector<28x112xf32> to vector<5x112xf32>
    %129 = tpu.concatenate %127, %128 in 0 : vector<5x112xf32>, vector<5x112xf32> -> vector<10x112xf32>
    %130 = vector.extract_strided_slice %117 {offsets = [2, 0], sizes = [5, 112], strides = [1, 1]} : vector<28x112xf32> to vector<5x112xf32>
    %131 = vector.extract_strided_slice %117 {offsets = [9, 0], sizes = [5, 112], strides = [1, 1]} : vector<28x112xf32> to vector<5x112xf32>
    %132 = tpu.concatenate %130, %131 in 0 : vector<5x112xf32>, vector<5x112xf32> -> vector<10x112xf32>
    %133 = tpu.concatenate %120, %123, %126, %129, %132 in 1 : vector<10x112xf32>, vector<10x112xf32>, vector<10x112xf32>, vector<10x112xf32>, vector<10x112xf32> -> vector<10x560xf32>
    %134 = vector.extract_strided_slice %117 {offsets = [14, 0], sizes = [5, 112], strides = [1, 1]} : vector<28x112xf32> to vector<5x112xf32>
    %135 = vector.extract_strided_slice %117 {offsets = [21, 0], sizes = [5, 112], strides = [1, 1]} : vector<28x112xf32> to vector<5x112xf32>
    %136 = tpu.concatenate %134, %135 in 0 : vector<5x112xf32>, vector<5x112xf32> -> vector<10x112xf32>
    %137 = vector.extract_strided_slice %117 {offsets = [1, 0], sizes = [5, 112], strides = [1, 1]} : vector<28x112xf32> to vector<5x112xf32>
    %138 = vector.extract_strided_slice %117 {offsets = [8, 0], sizes = [5, 112], strides = [1, 1]} : vector<28x112xf32> to vector<5x112xf32>
    %139 = tpu.concatenate %137, %138 in 0 : vector<5x112xf32>, vector<5x112xf32> -> vector<10x112xf32>
    %140 = vector.extract_strided_slice %117 {offsets = [15, 0], sizes = [5, 112], strides = [1, 1]} : vector<28x112xf32> to vector<5x112xf32>
    %141 = vector.extract_strided_slice %117 {offsets = [22, 0], sizes = [5, 112], strides = [1, 1]} : vector<28x112xf32> to vector<5x112xf32>
    %142 = tpu.concatenate %140, %141 in 0 : vector<5x112xf32>, vector<5x112xf32> -> vector<10x112xf32>
    %143 = vector.extract_strided_slice %117 {offsets = [2, 0], sizes = [5, 112], strides = [1, 1]} : vector<28x112xf32> to vector<5x112xf32>
    %144 = vector.extract_strided_slice %117 {offsets = [9, 0], sizes = [5, 112], strides = [1, 1]} : vector<28x112xf32> to vector<5x112xf32>
    %145 = tpu.concatenate %143, %144 in 0 : vector<5x112xf32>, vector<5x112xf32> -> vector<10x112xf32>
    %146 = vector.extract_strided_slice %117 {offsets = [16, 0], sizes = [5, 112], strides = [1, 1]} : vector<28x112xf32> to vector<5x112xf32>
    %147 = vector.extract_strided_slice %117 {offsets = [23, 0], sizes = [5, 112], strides = [1, 1]} : vector<28x112xf32> to vector<5x112xf32>
    %148 = tpu.concatenate %146, %147 in 0 : vector<5x112xf32>, vector<5x112xf32> -> vector<10x112xf32>
    %149 = tpu.concatenate %136, %139, %142, %145, %148 in 1 : vector<10x112xf32>, vector<10x112xf32>, vector<10x112xf32>, vector<10x112xf32>, vector<10x112xf32> -> vector<10x560xf32>
    %150 = tpu.concatenate %133, %149 in 0 : vector<10x560xf32>, vector<10x560xf32> -> vector<20x560xf32>
    %c0_161 = arith.constant 0 : index
    %c0_162 = arith.constant 0 : index
    %151 = vector.load %arg3[%c0_161, %c0_162] : memref<560x160xf32, #tpu.memory_space<vmem>>, vector<560x160xf32>
    %cst_163 = arith.constant dense<0.000000e+00> : vector<20x160xf32>
    %152 = tpu.matmul %150, %151, %cst_163 {dimension_numbers = #tpu.dot_dimension_numbers<[1], [0], [0], [1], [0, 0, 1, 1], [], []>} : vector<20x560xf32>, vector<560x160xf32>, vector<20x160xf32> -> vector<20x160xf32>
    %c0_164 = arith.constant 0 : index
    %c0_165 = arith.constant 0 : index
    %153 = vector.load %arg4[%c0_164, %c0_165] : memref<1x160xf32, #tpu.memory_space<vmem>>, vector<1x160xf32>
    %154 = vector.broadcast %153 : vector<1x160xf32> to vector<20x160xf32>
    %155 = arith.addf %152, %154 : vector<20x160xf32>
    %cst_166 = arith.constant 0.000000e+00 : f32
    %156 = vector.broadcast %cst_166 : f32 to vector<20x160xf32>
    %157 = arith.maximumf %155, %156 : vector<20x160xf32>
    %158 = vector.extract_strided_slice %157 {offsets = [0, 0], sizes = [10, 160], strides = [1, 1]} : vector<20x160xf32> to vector<10x160xf32>
    %159 = vector.extract_strided_slice %157 {offsets = [10, 0], sizes = [10, 160], strides = [1, 1]} : vector<20x160xf32> to vector<10x160xf32>
    %160 = arith.maximumf %158, %159 : vector<10x160xf32>
    %161 = vector.extract_strided_slice %160 {offsets = [0, 0], sizes = [10, 80], strides = [1, 1]} : vector<10x160xf32> to vector<10x80xf32>
    %162 = vector.extract_strided_slice %160 {offsets = [0, 80], sizes = [10, 80], strides = [1, 1]} : vector<10x160xf32> to vector<10x80xf32>
    %163 = arith.maximumf %161, %162 : vector<10x80xf32>
    %164 = vector.extract_strided_slice %163 {offsets = [0, 0], sizes = [1, 80], strides = [1, 1]} : vector<10x80xf32> to vector<1x80xf32>
    %165 = vector.extract_strided_slice %163 {offsets = [1, 0], sizes = [1, 80], strides = [1, 1]} : vector<10x80xf32> to vector<1x80xf32>
    %166 = vector.extract_strided_slice %163 {offsets = [2, 0], sizes = [1, 80], strides = [1, 1]} : vector<10x80xf32> to vector<1x80xf32>
    %167 = vector.extract_strided_slice %163 {offsets = [3, 0], sizes = [1, 80], strides = [1, 1]} : vector<10x80xf32> to vector<1x80xf32>
    %168 = vector.extract_strided_slice %163 {offsets = [4, 0], sizes = [1, 80], strides = [1, 1]} : vector<10x80xf32> to vector<1x80xf32>
    %169 = tpu.concatenate %164, %165, %166, %167, %168 in 1 : vector<1x80xf32>, vector<1x80xf32>, vector<1x80xf32>, vector<1x80xf32>, vector<1x80xf32> -> vector<1x400xf32>
    %170 = vector.extract_strided_slice %163 {offsets = [5, 0], sizes = [1, 80], strides = [1, 1]} : vector<10x80xf32> to vector<1x80xf32>
    %171 = vector.extract_strided_slice %163 {offsets = [6, 0], sizes = [1, 80], strides = [1, 1]} : vector<10x80xf32> to vector<1x80xf32>
    %172 = vector.extract_strided_slice %163 {offsets = [7, 0], sizes = [1, 80], strides = [1, 1]} : vector<10x80xf32> to vector<1x80xf32>
    %173 = vector.extract_strided_slice %163 {offsets = [8, 0], sizes = [1, 80], strides = [1, 1]} : vector<10x80xf32> to vector<1x80xf32>
    %174 = vector.extract_strided_slice %163 {offsets = [9, 0], sizes = [1, 80], strides = [1, 1]} : vector<10x80xf32> to vector<1x80xf32>
    %175 = tpu.concatenate %170, %171, %172, %173, %174 in 1 : vector<1x80xf32>, vector<1x80xf32>, vector<1x80xf32>, vector<1x80xf32>, vector<1x80xf32> -> vector<1x400xf32>
    %176 = tpu.concatenate %169, %175 in 0 : vector<1x400xf32>, vector<1x400xf32> -> vector<2x400xf32>
    %c0_167 = arith.constant 0 : index
    %c0_168 = arith.constant 0 : index
    %177 = vector.load %arg5[%c0_167, %c0_168] : memref<400x128xf32, #tpu.memory_space<vmem>>, vector<400x128xf32>
    %cst_169 = arith.constant dense<0.000000e+00> : vector<2x128xf32>
    %178 = tpu.matmul %176, %177, %cst_169 {dimension_numbers = #tpu.dot_dimension_numbers<[1], [0], [0], [1], [0, 0, 1, 1], [], []>} : vector<2x400xf32>, vector<400x128xf32>, vector<2x128xf32> -> vector<2x128xf32>
    %c0_170 = arith.constant 0 : index
    %c0_171 = arith.constant 0 : index
    %179 = vector.load %arg6[%c0_170, %c0_171] : memref<1x128xf32, #tpu.memory_space<vmem>>, vector<1x128xf32>
    %180 = vector.broadcast %179 : vector<1x128xf32> to vector<2x128xf32>
    %181 = arith.addf %178, %180 : vector<2x128xf32>
    %cst_172 = arith.constant 0.000000e+00 : f32
    %182 = vector.broadcast %cst_172 : f32 to vector<2x128xf32>
    %183 = arith.maximumf %181, %182 : vector<2x128xf32>
    %c0_173 = arith.constant 0 : index
    %c0_174 = arith.constant 0 : index
    %184 = vector.load %arg7[%c0_173, %c0_174] : memref<128x128xf32, #tpu.memory_space<vmem>>, vector<128x128xf32>
    %cst_175 = arith.constant dense<0.000000e+00> : vector<2x128xf32>
    %185 = tpu.matmul %183, %184, %cst_175 {dimension_numbers = #tpu.dot_dimension_numbers<[1], [0], [0], [1], [0, 0, 1, 1], [], []>} : vector<2x128xf32>, vector<128x128xf32>, vector<2x128xf32> -> vector<2x128xf32>
    %c0_176 = arith.constant 0 : index
    %c0_177 = arith.constant 0 : index
    %186 = vector.load %arg8[%c0_176, %c0_177] : memref<1x128xf32, #tpu.memory_space<vmem>>, vector<1x128xf32>
    %187 = vector.broadcast %186 : vector<1x128xf32> to vector<2x128xf32>
    %188 = arith.addf %185, %187 : vector<2x128xf32>
    %cst_178 = arith.constant 0.000000e+00 : f32
    %189 = vector.broadcast %cst_178 : f32 to vector<2x128xf32>
    %190 = arith.maximumf %188, %189 : vector<2x128xf32>
    %c0_179 = arith.constant 0 : index
    %c0_180 = arith.constant 0 : index
    %191 = vector.load %arg9[%c0_179, %c0_180] : memref<128x10xf32, #tpu.memory_space<vmem>>, vector<128x10xf32>
    %cst_181 = arith.constant dense<0.000000e+00> : vector<2x10xf32>
    %192 = tpu.matmul %190, %191, %cst_181 {dimension_numbers = #tpu.dot_dimension_numbers<[1], [0], [0], [1], [0, 0, 1, 1], [], []>} : vector<2x128xf32>, vector<128x10xf32>, vector<2x10xf32> -> vector<2x10xf32>
    %c0_182 = arith.constant 0 : index
    %c0_183 = arith.constant 0 : index
    %193 = vector.load %arg10[%c0_182, %c0_183] : memref<1x10xf32, #tpu.memory_space<vmem>>, vector<1x10xf32>
    %194 = vector.broadcast %193 : vector<1x10xf32> to vector<2x10xf32>
    %195 = arith.addf %192, %194 : vector<2x10xf32>
    %c0_184 = arith.constant 0 : index
    %c0_185 = arith.constant 0 : index
    %196 = vector.load %arg11[%c0_184, %c0_185] : memref<2x10xf32, #tpu.memory_space<vmem>>, vector<2x10xf32>
    tpu.vector_store %arg11[%c0_184, %c0_185], %195 {strides = array<i32>} : memref<2x10xf32, #tpu.memory_space<vmem>>, vector<2x10xf32>,
    return
  }
}

</mosaic_0001>

<llo_original>
// kernel: net_forward.1
$region0: #{net_forward.1}
  #allocation0 [shape = 'u32[]', space=smem, size = 0x4, offset = 0x4, fixed_abs, tag = 'smem constant byte address 0x4 - core index']
  #allocation1 [shape = 'u32[72,128]{1,0:T(1,128)}', space=vmem, size = 0x9000, scoped, tag = 'internal scratch']
  %s0 = inlined_call_operand.vmem [shape: f32[4,2,8,32], index: 0, kind: input, shape index: {}]
  %s1 = inlined_call_operand.vmem [shape: f32[160,224], index: 1, kind: input, shape index: {}]
  %s2 = inlined_call_operand.vmem [shape: f32[1,224], index: 2, kind: input, shape index: {}]
  %s3 = inlined_call_operand.vmem [shape: f32[560,160], index: 3, kind: input, shape index: {}]
  %s4 = inlined_call_operand.vmem [shape: f32[1,160], index: 4, kind: input, shape index: {}]
  %s5 = inlined_call_operand.vmem [shape: f32[400,128], index: 5, kind: input, shape index: {}]
  %s6 = inlined_call_operand.vmem [shape: f32[1,128], index: 6, kind: input, shape index: {}]
  %s7 = inlined_call_operand.vmem [shape: f32[128,128], index: 7, kind: input, shape index: {}]
  %s8 = inlined_call_operand.vmem [shape: f32[1,128], index: 8, kind: input, shape index: {}]
  %s9 = inlined_call_operand.vmem [shape: f32[128,10], index: 9, kind: input, shape index: {}]
  %s10 = inlined_call_operand.vmem [shape: f32[1,10], index: 10, kind: input, shape index: {}]
  %s11 = inlined_call_operand.hbm [shape: f32[2,10], index: 11, kind: output, shape index: {}]
  %s12 = sld [smem:[#allocation0]]
  $region54: #{net_forward.1} parent=0
    _
  %s14 = ssub.s32 1, %s12
  %s15 = scalar_select 0, %s14, %s12
  $region1: #{net_forward.1} parent=0
    #allocation2 [shape = 'u8[1024]{0}', space=vmem, size = 0x400, scoped, tag = 'output window, operand 0, single buffered']
    #allocation3 [shape = 's32[1]{0}', space=sflag, size = 0x4, scoped, tag = 'scoped memory for net_forward.1']
    %16 = vsyncpa [#allocation3], 0
    // Predicated region
    $region2: #{net_forward.1} parent=1 // pred_check
      _
    $region3: #{net_forward.1} parent=1 // pred_check_branch
      %18 = sbr.rel (0) target = $region5
    $region4: #{net_forward.1} parent=1 // pred_region
      _
    $region5: #{net_forward.1} parent=1 // pred_fallthru
      _
    // Predicated region
    $region6: #{net_forward.1} parent=1 // pred_check
      _
    $region7: #{net_forward.1} parent=1 // pred_check_branch
      %20 = sbr.rel (0) target = $region9
    $region8: #{net_forward.1} parent=1 // pred_region
      _
    $region9: #{net_forward.1} parent=1 // pred_fallthru
      _
    // Predicated region
    $region10: #{net_forward.1} parent=1 // pred_check
      _
    $region11: #{net_forward.1} parent=1 // pred_check_branch
      %22 = sbr.rel (0) target = $region13
    $region12: #{net_forward.1} parent=1 // pred_region
      _
    $region13: #{net_forward.1} parent=1 // pred_fallthru
      _
    // Predicated region
    $region14: #{net_forward.1} parent=1 // pred_check
      _
    $region15: #{net_forward.1} parent=1 // pred_check_branch
      %24 = sbr.rel (0) target = $region17
    $region16: #{net_forward.1} parent=1 // pred_region
      _
    $region17: #{net_forward.1} parent=1 // pred_fallthru
      _
    // Predicated region
    $region18: #{net_forward.1} parent=1 // pred_check
      _
    $region19: #{net_forward.1} parent=1 // pred_check_branch
      %26 = sbr.rel (0) target = $region21
    $region20: #{net_forward.1} parent=1 // pred_region
      _
    $region21: #{net_forward.1} parent=1 // pred_fallthru
      _
    // Predicated region
    $region22: #{net_forward.1} parent=1 // pred_check
      _
    $region23: #{net_forward.1} parent=1 // pred_check_branch
      %28 = sbr.rel (0) target = $region25
    $region24: #{net_forward.1} parent=1 // pred_region
      _
    $region25: #{net_forward.1} parent=1 // pred_fallthru
      _
    // Predicated region
    $region26: #{net_forward.1} parent=1 // pred_check
      _
    $region27: #{net_forward.1} parent=1 // pred_check_branch
      %30 = sbr.rel (0) target = $region29
    $region28: #{net_forward.1} parent=1 // pred_region
      _
    $region29: #{net_forward.1} parent=1 // pred_fallthru
      _
    // Predicated region
    $region30: #{net_forward.1} parent=1 // pred_check
      _
    $region31: #{net_forward.1} parent=1 // pred_check_branch
      %32 = sbr.rel (0) target = $region33
    $region32: #{net_forward.1} parent=1 // pred_region
      _
    $region33: #{net_forward.1} parent=1 // pred_fallthru
      _
    // Predicated region
    $region34: #{net_forward.1} parent=1 // pred_check
      _
    $region35: #{net_forward.1} parent=1 // pred_check_branch
      %34 = sbr.rel (0) target = $region37
    $region36: #{net_forward.1} parent=1 // pred_region
      _
    $region37: #{net_forward.1} parent=1 // pred_fallthru
      _
    // Predicated region
    $region38: #{net_forward.1} parent=1 // pred_check
      _
    $region39: #{net_forward.1} parent=1 // pred_check_branch
      %36 = sbr.rel (0) target = $region41
    $region40: #{net_forward.1} parent=1 // pred_region
      _
    $region41: #{net_forward.1} parent=1 // pred_fallthru
      _
    // Predicated region
    $region42: #{net_forward.1} parent=1 // pred_check
      _
    $region43: #{net_forward.1} parent=1 // pred_check_branch
      %38 = sbr.rel (0) target = $region45
    $region44: #{net_forward.1} parent=1 // pred_region
      _
    $region45: #{net_forward.1} parent=1 // pred_fallthru
      _
    %v39 = vld [vmem:[%s0] sm:$0x7f]
    %s40 = scalar_lea.vmem %s0, 8
    %v41 = vld [vmem:[%s40] sm:$0x7f]
    %v43 = vrot.slane %v41, 1
    %vm45 = vcmask 1046528
    %v46 = vsel %vm45, %v39, %v43
    %s47 = scalar_lea.vmem %s0, 16
    %v48 = vld [vmem:[%s47] sm:$0x7f]
    %s49 = scalar_lea.vmem %s0, 24
    %v50 = vld [vmem:[%s49] sm:$0x7f]
    %v52 = vrot.slane %v50, 1
    %v54 = vsel %vm45, %v48, %v52
    %s55 = scalar_lea.vmem %s0, 32
    %v56 = vld [vmem:[%s55] sm:$0x7f]
    %s57 = scalar_lea.vmem %s0, 40
    %v58 = vld [vmem:[%s57] sm:$0x7f]
    %v60 = vrot.slane %v58, 1
    %v62 = vsel %vm45, %v56, %v60
    %s63 = scalar_lea.vmem %s0, 48
    %v64 = vld [vmem:[%s63] sm:$0x7f]
    %s65 = scalar_lea.vmem %s0, 56
    %v66 = vld [vmem:[%s65] sm:$0x7f]
    %v68 = vrot.slane %v66, 1
    %v70 = vsel %vm45, %v64, %v68
    %v71 = vld [vmem:[%s0 + $0x1] sm:$0x7f]
    %v72 = vld [vmem:[%s40 + $0x1] sm:$0x7f]
    %v74 = vrot.slane %v72, 1
    %v76 = vsel %vm45, %v71, %v74
    %78 = vrot.lane.b32.xlu0 %v54, 32
    %v79 = vpop.permute.xlu0 %78
    %80 = vrot.lane.b32.xlu0 %v52, 32
    %v81 = vpop.permute.xlu0 %80
    %85 = vrot.lane.b32.xlu0 %v62, 64
    %v86 = vpop.permute.xlu0 %85
    %87 = vrot.lane.b32.xlu0 %v60, 64
    %v88 = vpop.permute.xlu0 %87
    %92 = vrot.lane.b32.xlu0 %v70, 96
    %v93 = vpop.permute.xlu0 %92
    %94 = vrot.lane.b32.xlu0 %v68, 96
    %v95 = vpop.permute.xlu0 %94
    %vm98 = vcmask 261120
    %v99 = vsel %vm98, %v46, %v79
    %v100 = vsel %vm98, %v43, %v81
    %vm101 = vcmask 523264
    %v102 = vsel %vm101, %v99, %v86
    %v103 = vsel %vm101, %v100, %v88
    %vm104 = vcmask 785408
    %v105 = vsel %vm104, %v102, %v93
    %v106 = vsel %vm104, %v103, %v95
    %v107 = vld [vmem:[%s47 + $0x1] sm:$0x7f]
    %v108 = vld [vmem:[%s49 + $0x1] sm:$0x7f]
    %v110 = vrot.slane %v108, 1
    %v112 = vsel %vm45, %v107, %v110
    %v113 = vld [vmem:[%s55 + $0x1] sm:$0x7f]
    %v114 = vld [vmem:[%s57 + $0x1] sm:$0x7f]
    %v116 = vrot.slane %v114, 1
    %v118 = vsel %vm45, %v113, %v116
    %119 = vrot.lane.b32.xlu0 %v70, 32
    %v120 = vpop.permute.xlu0 %119
    %121 = vrot.lane.b32.xlu0 %v68, 32
    %v122 = vpop.permute.xlu0 %121
    %126 = vrot.lane.b32.xlu0 %v76, 64
    %v127 = vpop.permute.xlu0 %126
    %128 = vrot.lane.b32.xlu0 %v74, 64
    %v129 = vpop.permute.xlu0 %128
    %133 = vrot.lane.b32.xlu0 %v112, 96
    %v134 = vpop.permute.xlu0 %133
    %135 = vrot.lane.b32.xlu0 %v110, 96
    %v136 = vpop.permute.xlu0 %135
    %v139 = vsel %vm98, %v62, %v120
    %v140 = vsel %vm98, %v60, %v122
    %v141 = vsel %vm101, %v139, %v127
    %v142 = vsel %vm101, %v140, %v129
    %v143 = vsel %vm104, %v141, %v134
    %v144 = vsel %vm104, %v142, %v136
    %145 = vrot.lane.b32.xlu0 %v62, 32
    %v146 = vpop.permute.xlu0 %145
    %147 = vrot.lane.b32.xlu0 %v60, 32
    %v148 = vpop.permute.xlu0 %147
    %151 = vrot.lane.b32.xlu0 %v70, 64
    %v152 = vpop.permute.xlu0 %151
    %153 = vrot.lane.b32.xlu0 %v68, 64
    %v154 = vpop.permute.xlu0 %153
    %157 = vrot.lane.b32.xlu0 %v76, 96
    %v158 = vpop.permute.xlu0 %157
    %159 = vrot.lane.b32.xlu0 %v74, 96
    %v160 = vpop.permute.xlu0 %159
    %v163 = vsel %vm98, %v54, %v146
    %v164 = vsel %vm98, %v52, %v148
    %v165 = vsel %vm101, %v163, %v152
    %v166 = vsel %vm101, %v164, %v154
    %v167 = vsel %vm104, %v165, %v158
    %v168 = vsel %vm104, %v166, %v160
    %v169 = vld [vmem:[%s63 + $0x1] sm:$0x7f]
    %v170 = vld [vmem:[%s65 + $0x1] sm:$0x7f]
    %v172 = vrot.slane %v170, 1
    %v174 = vsel %vm45, %v169, %v172
    %175 = vrot.lane.b32.xlu0 %v76, 32
    %v176 = vpop.permute.xlu0 %175
    %177 = vrot.lane.b32.xlu0 %v74, 32
    %v178 = vpop.permute.xlu0 %177
    %181 = vrot.lane.b32.xlu0 %v112, 64
    %v182 = vpop.permute.xlu0 %181
    %183 = vrot.lane.b32.xlu0 %v110, 64
    %v184 = vpop.permute.xlu0 %183
    %188 = vrot.lane.b32.xlu0 %v118, 96
    %v189 = vpop.permute.xlu0 %188
    %190 = vrot.lane.b32.xlu0 %v116, 96
    %v191 = vpop.permute.xlu0 %190
    %v194 = vsel %vm98, %v70, %v176
    %v195 = vsel %vm98, %v68, %v178
    %v196 = vsel %vm101, %v194, %v182
    %v197 = vsel %vm101, %v195, %v184
    %v198 = vsel %vm104, %v196, %v189
    %v199 = vsel %vm104, %v197, %v191
    %vm202 = vcmask 1045504
    %v203 = vrot.slane %v143, 2
    %v204 = vrot.slane %v118, 2
    %v205 = vrot.slane %v144, 2
    %v206 = vsel %vm202, %v203, %v205
    %v207 = vrot.slane %v116, 2
    %v208 = vsel %vm202, %v204, %v207
    %vm216 = vcmask 1043456
    %v217 = vrot.slane %v167, 4
    %v218 = vrot.slane %v112, 4
    %v219 = vrot.slane %v168, 4
    %v220 = vsel %vm216, %v217, %v219
    %v221 = vrot.slane %v110, 4
    %v222 = vsel %vm216, %v218, %v221
    %vm231 = vcmask 1041408
    %v232 = vrot.slane %v198, 6
    %v233 = vrot.slane %v174, 6
    %v234 = vrot.slane %v199, 6
    %v235 = vsel %vm231, %v232, %v234
    %v236 = vrot.slane %v172, 6
    %v237 = vsel %vm231, %v233, %v236
    %v241 = vsel %vm202, %v106, %v203
    %v242 = vsel %vm202, %v74, %v204
    %v243 = vsel %vm216, %v205, %v217
    %v244 = vsel %vm216, %v207, %v218
    %v245 = vsel %vm231, %v219, %v232
    %v246 = vsel %vm231, %v221, %v233
    %v247 = vld [vmem:[%s1] sm:$0xff]
    %v248 = vld [vmem:[%s1 + $0x8] sm:$0xff]
    %v249 = vld [vmem:[%s1 + $0x10] sm:$0xff]
    %v250 = vld [vmem:[%s1 + $0x18] sm:$0xff]
    %v251 = vld [vmem:[%s1 + $0x20] sm:$0xff]
    %v252 = vld [vmem:[%s1 + $0x28] sm:$0xff]
    %v253 = vld [vmem:[%s1 + $0x30] sm:$0xff]
    %v254 = vld [vmem:[%s1 + $0x38] sm:$0xff]
    %v255 = vld [vmem:[%s1 + $0x40] sm:$0xff]
    %v256 = vld [vmem:[%s1 + $0x48] sm:$0xff]
    %v257 = vld [vmem:[%s1 + $0x50] sm:$0xff]
    %v258 = vld [vmem:[%s1 + $0x58] sm:$0xff]
    %v259 = vld [vmem:[%s1 + $0x60] sm:$0xff]
    %v260 = vld [vmem:[%s1 + $0x68] sm:$0xff]
    %v261 = vld [vmem:[%s1 + $0x70] sm:$0xff]
    %v262 = vld [vmem:[%s1 + $0x78] sm:$0xff]
    %v263 = vld [vmem:[%s1 + $0x80] sm:$0xff]
    %v264 = vld [vmem:[%s1 + $0x88] sm:$0xff]
    %v265 = vld [vmem:[%s1 + $0x90] sm:$0xff]
    %v266 = vld [vmem:[%s1 + $0x98] sm:$0xff]
    %v267 = vld [vmem:[%s1 + $0xa0] sm:$0xff]
    %v268 = vld [vmem:[%s1 + $0xa8] sm:$0xff]
    %v269 = vld [vmem:[%s1 + $0xb0] sm:$0xff]
    %v270 = vld [vmem:[%s1 + $0xb8] sm:$0xff]
    %v271 = vld [vmem:[%s1 + $0xc0] sm:$0xff]
    %v272 = vld [vmem:[%s1 + $0xc8] sm:$0xff]
    %v273 = vld [vmem:[%s1 + $0xd0] sm:$0xff]
    %v274 = vld [vmem:[%s1 + $0xd8] sm:$0xff]
    %v275 = vld [vmem:[%s1 + $0xe0] sm:$0xff]
    %v276 = vld [vmem:[%s1 + $0xe8] sm:$0xff]
    %v277 = vld [vmem:[%s1 + $0xf0] sm:$0xff]
    %v278 = vld [vmem:[%s1 + $0xf8] sm:$0xff]
    %v279 = vld [vmem:[%s1 + $0x100] sm:$0xff]
    %v280 = vld [vmem:[%s1 + $0x108] sm:$0xff]
    %v281 = vld [vmem:[%s1 + $0x110] sm:$0xff]
    %v282 = vld [vmem:[%s1 + $0x118] sm:$0xff]
    %v283 = vld [vmem:[%s1 + $0x120] sm:$0xff]
    %v284 = vld [vmem:[%s1 + $0x128] sm:$0xff]
    %v285 = vld [vmem:[%s1 + $0x130] sm:$0xff]
    %v286 = vld [vmem:[%s1 + $0x138] sm:$0xff]
    %v287 = vld [vmem:[%s2] sm:$0x3]
    %v289 = vperm.slane %v287, 0
    %v290 = vperm.slane %v287, 1
    %v293 = vsel %vm98, %v76, 0
    %v296 = vsel %vm98, %v242, 0
    %v298 = vsel %vm98, %v208, 0
    %v301 = vsel %vm98, %v244, 0
    %v303 = vsel %vm98, %v222, 0
    %v306 = vsel %vm98, %v246, 0
    %v308 = vsel %vm98, %v237, 0
    %310 = vmatpush.msra.mxu0 %v277
    %311 = vmatpush.msra.mxu0 %v275
    %312 = vmatpush.msra.mxu0 %v273
    %313 = vmatpush.msra.mxu0 %v271
    %314 = vmatpush.msra.mxu0 %v269
    %315 = vmatpush.msra.mxu0 %v267
    %316 = vmatpush.msra.mxu0 %v265
    %317 = vmatpush.msra.mxu0 %v263
    %318 = vmatpush.msra.mxu0 %v261
    %319 = vmatpush.msra.mxu0 %v259
    %320 = vmatpush.msra.mxu0 %v257
    %321 = vmatpush.msra.mxu0 %v255
    %322 = vmatpush.msra.mxu0 %v253
    %323 = vmatpush.msra.mxu0 %v251
    %324 = vmatpush.msra.mxu0 %v249
    %325 = vmatpush.msra.mxu0 %v247
    %326 = vmatmul.f32.gmra.mxu0 %v105
    %v327 = vpop.f32.mrf.mxu0
    %v328 = vadd.f32 %v289, %v327
    %329 = vmatmul.f32.gmra.mxu0 %v241
    %v330 = vpop.f32.mrf.mxu0
    %v331 = vadd.f32 %v289, %v330
    %332 = vmatmul.f32.gmra.mxu0 %v206
    %v333 = vpop.f32.mrf.mxu0
    %v334 = vadd.f32 %v289, %v333
    %335 = vmatmul.f32.gmra.mxu0 %v243
    %v336 = vpop.f32.mrf.mxu0
    %v337 = vadd.f32 %v289, %v336
    %338 = vmatmul.f32.gmra.mxu0 %v220
    %v339 = vpop.f32.mrf.mxu0
    %v340 = vadd.f32 %v289, %v339
    %341 = vmatmul.f32.gmra.mxu0 %v245
    %v342 = vpop.f32.mrf.mxu0
    %v343 = vadd.f32 %v289, %v342
    %344 = vmatmul.f32.gmra.mxu0 %v235
    %v345 = vpop.f32.mrf.mxu0
    %v346 = vadd.f32 %v289, %v345
    %347 = vdwg.mxu0
    %348 = vmatpush.msra.mxu0 0.0
    %349 = vmatpush.msra.mxu0 0.0
    %350 = vmatpush.msra.mxu0 0.0
    %351 = vmatpush.msra.mxu0 0.0
    %352 = vmatpush.msra.mxu0 0.0
    %353 = vmatpush.msra.mxu0 0.0
    %354 = vmatpush.msra.mxu0 0.0
    %355 = vmatpush.msra.mxu0 0.0
    %356 = vmatpush.msra.mxu0 0.0
    %357 = vmatpush.msra.mxu0 0.0
    %358 = vmatpush.msra.mxu0 0.0
    %359 = vmatpush.msra.mxu0 0.0
    %360 = vmatpush.msra.mxu0 %v285
    %361 = vmatpush.msra.mxu0 %v283
    %362 = vmatpush.msra.mxu0 %v281
    %363 = vmatpush.msra.mxu0 %v279
    %364 = vmatmul.f32.gmra.mxu0 %v293
    %v365 = vpop.f32.mrf.mxu0
    %v366 = vadd.f32 %v328, %v365
    %367 = vmatmul.f32.gmra.mxu0 %v296
    %v368 = vpop.f32.mrf.mxu0
    %v369 = vadd.f32 %v331, %v368
    %370 = vmatmul.f32.gmra.mxu0 %v298
    %v371 = vpop.f32.mrf.mxu0
    %v372 = vadd.f32 %v334, %v371
    %373 = vmatmul.f32.gmra.mxu0 %v301
    %v374 = vpop.f32.mrf.mxu0
    %v375 = vadd.f32 %v337, %v374
    %376 = vmatmul.f32.gmra.mxu0 %v303
    %v377 = vpop.f32.mrf.mxu0
    %v378 = vadd.f32 %v340, %v377
    %379 = vmatmul.f32.gmra.mxu0 %v306
    %v380 = vpop.f32.mrf.mxu0
    %v381 = vadd.f32 %v343, %v380
    %382 = vmatmul.f32.gmra.mxu0 %v308
    %v383 = vpop.f32.mrf.mxu0
    %v384 = vadd.f32 %v346, %v383
    %385 = vdwg.mxu0
    %386 = vmatpush.msra.mxu0 %v278
    %387 = vmatpush.msra.mxu0 %v276
    %388 = vmatpush.msra.mxu0 %v274
    %389 = vmatpush.msra.mxu0 %v272
    %390 = vmatpush.msra.mxu0 %v270
    %391 = vmatpush.msra.mxu0 %v268
    %392 = vmatpush.msra.mxu0 %v266
    %393 = vmatpush.msra.mxu0 %v264
    %394 = vmatpush.msra.mxu0 %v262
    %395 = vmatpush.msra.mxu0 %v260
    %396 = vmatpush.msra.mxu0 %v258
    %397 = vmatpush.msra.mxu0 %v256
    %398 = vmatpush.msra.mxu0 %v254
    %399 = vmatpush.msra.mxu0 %v252
    %400 = vmatpush.msra.mxu0 %v250
    %401 = vmatpush.msra.mxu0 %v248
    %402 = vmatmul.f32.gmra.mxu0 %v105
    %v403 = vpop.f32.mrf.mxu0
    %v404 = vadd.f32 %v290, %v403
    %405 = vmatmul.f32.gmra.mxu0 %v241
    %v406 = vpop.f32.mrf.mxu0
    %v407 = vadd.f32 %v290, %v406
    %408 = vmatmul.f32.gmra.mxu0 %v206
    %v409 = vpop.f32.mrf.mxu0
    %v410 = vadd.f32 %v290, %v409
    %411 = vmatmul.f32.gmra.mxu0 %v243
    %v412 = vpop.f32.mrf.mxu0
    %v413 = vadd.f32 %v290, %v412
    %414 = vmatmul.f32.gmra.mxu0 %v220
    %v415 = vpop.f32.mrf.mxu0
    %v416 = vadd.f32 %v290, %v415
    %417 = vmatmul.f32.gmra.mxu0 %v245
    %v418 = vpop.f32.mrf.mxu0
    %v419 = vadd.f32 %v290, %v418
    %420 = vmatmul.f32.gmra.mxu0 %v235
    %v421 = vpop.f32.mrf.mxu0
    %v422 = vadd.f32 %v290, %v421
    %423 = vdwg.mxu0
    %424 = vmatpush.msra.mxu0 0.0
    %425 = vmatpush.msra.mxu0 0.0
    %426 = vmatpush.msra.mxu0 0.0
    %427 = vmatpush.msra.mxu0 0.0
    %428 = vmatpush.msra.mxu0 0.0
    %429 = vmatpush.msra.mxu0 0.0
    %430 = vmatpush.msra.mxu0 0.0
    %431 = vmatpush.msra.mxu0 0.0
    %432 = vmatpush.msra.mxu0 0.0
    %433 = vmatpush.msra.mxu0 0.0
    %434 = vmatpush.msra.mxu0 0.0
    %435 = vmatpush.msra.mxu0 0.0
    %436 = vmatpush.msra.mxu0 %v286
    %437 = vmatpush.msra.mxu0 %v284
    %438 = vmatpush.msra.mxu0 %v282
    %439 = vmatpush.msra.mxu0 %v280
    %440 = vmatmul.f32.gmra.mxu0 %v293
    %v441 = vpop.f32.mrf.mxu0
    %v442 = vadd.f32 %v404, %v441
    %443 = vmatmul.f32.gmra.mxu0 %v296
    %v444 = vpop.f32.mrf.mxu0
    %v445 = vadd.f32 %v407, %v444
    %446 = vmatmul.f32.gmra.mxu0 %v298
    %v447 = vpop.f32.mrf.mxu0
    %v448 = vadd.f32 %v410, %v447
    %449 = vmatmul.f32.gmra.mxu0 %v301
    %v450 = vpop.f32.mrf.mxu0
    %v451 = vadd.f32 %v413, %v450
    %452 = vmatmul.f32.gmra.mxu0 %v303
    %v453 = vpop.f32.mrf.mxu0
    %v454 = vadd.f32 %v416, %v453
    %455 = vmatmul.f32.gmra.mxu0 %v306
    %v456 = vpop.f32.mrf.mxu0
    %v457 = vadd.f32 %v419, %v456
    %458 = vmatmul.f32.gmra.mxu0 %v308
    %v459 = vpop.f32.mrf.mxu0
    %v460 = vadd.f32 %v422, %v459
    %461 = vdwg.mxu0
    %v462 = vmax.f32 %v366, 0.0
    %v463 = vmax.f32 %v442, 0.0
    %v464 = vmax.f32 %v369, 0.0
    %v465 = vmax.f32 %v445, 0.0
    %v466 = vmax.f32 %v372, 0.0
    %v467 = vmax.f32 %v448, 0.0
    %v468 = vmax.f32 %v375, 0.0
    %v469 = vmax.f32 %v451, 0.0
    %v470 = vmax.f32 %v378, 0.0
    %v471 = vmax.f32 %v454, 0.0
    %v472 = vmax.f32 %v381, 0.0
    %v473 = vmax.f32 %v457, 0.0
    %v474 = vmax.f32 %v384, 0.0
    %v475 = vmax.f32 %v460, 0.0
    %v484 = vrot.slane %v468, 4
    %v485 = vrot.slane %v470, 4
    %v486 = vsel %vm216, %v484, %v485
    %v487 = vrot.slane %v469, 4
    %v488 = vrot.slane %v471, 4
    %v489 = vsel %vm216, %v487, %v488
    %v490 = vrot.slane %v472, 4
    %v491 = vsel %vm216, %v485, %v490
    %v492 = vrot.slane %v473, 4
    %v493 = vsel %vm216, %v488, %v492
    %v494 = vrot.slane %v474, 4
    %v495 = vsel %vm216, %v490, %v494
    %v496 = vrot.slane %v475, 4
    %v497 = vsel %vm216, %v492, %v496
    %v506 = vmax.f32 %v462, %v486
    %v507 = vmax.f32 %v463, %v489
    %v508 = vmax.f32 %v464, %v491
    %v509 = vmax.f32 %v465, %v493
    %v510 = vmax.f32 %v466, %v495
    %v511 = vmax.f32 %v467, %v497
    %v512 = vmax.f32 %v468, %v494
    %v513 = vmax.f32 %v469, %v496
    %522 = vrot.lane.b32.xlu0 %v506, 16
    %v523 = vpop.permute.xlu0 %522
    %524 = vrot.lane.b32.xlu0 %v507, 16
    %v525 = vpop.permute.xlu0 %524
    %526 = vrot.lane.b32.xlu0 %v508, 16
    %v527 = vpop.permute.xlu0 %526
    %528 = vrot.lane.b32.xlu0 %v509, 16
    %v529 = vpop.permute.xlu0 %528
    %530 = vrot.lane.b32.xlu0 %v510, 16
    %v531 = vpop.permute.xlu0 %530
    %532 = vrot.lane.b32.xlu0 %v511, 16
    %v533 = vpop.permute.xlu0 %532
    %534 = vrot.lane.b32.xlu0 %v512, 16
    %v535 = vpop.permute.xlu0 %534
    %536 = vrot.lane.b32.xlu0 %v513, 16
    %v537 = vpop.permute.xlu0 %536
    %vm538 = vcmask 130048
    %v539 = vsel %vm538, %v523, %v525
    %v540 = vsel %vm538, %v527, %v529
    %v541 = vsel %vm538, %v531, %v533
    %v542 = vsel %vm538, %v535, %v537
    %v547 = vmax.f32 %v506, %v539
    %v548 = vmax.f32 %v508, %v540
    %v549 = vmax.f32 %v510, %v541
    %v550 = vmax.f32 %v512, %v542
    %v553 = vrot.slane %v547, 2
    %v554 = vrot.slane %v548, 2
    %v555 = vsel %vm202, %v553, %v554
    %vm558 = vcmask 1044480
    %v559 = vsel %vm558, %v547, %v555
    %v561 = vrot.slane %v548, 6
    %v562 = vrot.slane %v549, 6
    %v563 = vsel %vm231, %v561, %v562
    %v565 = vsel %vm558, %v563, %v549
    %v566 = vrot.slane %v547, 1
    %v568 = vrot.slane %v548, 3
    %v570 = vsel %vm558, %v566, %v568
    %vm571 = vcmask 1040384
    %v572 = vrot.slane %v548, 7
    %v573 = vrot.slane %v549, 7
    %v574 = vsel %vm571, %v572, %v573
    %v577 = vrot.slane %v549, 1
    %v578 = vrot.slane %v550, 1
    %v579 = vsel %vm45, %v577, %v578
    %v581 = vsel %vm558, %v574, %v579
    %v583 = vrot.slane %v548, 4
    %v585 = vsel %vm558, %v553, %v583
    %587 = vrot.lane.b32.xlu0 %v565, 112
    %v588 = vpop.permute.xlu0 %587
    %589 = vrot.lane.b32.xlu0 %v550, 112
    %v590 = vpop.permute.xlu0 %589
    %594 = vrot.lane.b32.xlu0 %v570, 96
    %v595 = vpop.permute.xlu0 %594
    %596 = vrot.lane.b32.xlu0 %v568, 96
    %v597 = vpop.permute.xlu0 %596
    %601 = vrot.lane.b32.xlu0 %v581, 80
    %v602 = vpop.permute.xlu0 %601
    %603 = vrot.lane.b32.xlu0 %v578, 80
    %v604 = vpop.permute.xlu0 %603
    %608 = vrot.lane.b32.xlu0 %v585, 64
    %v609 = vpop.permute.xlu0 %608
    %610 = vrot.lane.b32.xlu0 %v583, 64
    %v611 = vpop.permute.xlu0 %610
    %vm614 = vcmask 916480
    %v615 = vsel %vm614, %v559, %v588
    %v616 = vsel %vm614, %v554, %v590
    %v617 = vsel %vm104, %v588, %v595
    %v618 = vsel %vm104, %v590, %v597
    %vm619 = vcmask 654336
    %v620 = vsel %vm619, %v595, %v602
    %v621 = vsel %vm619, %v597, %v604
    %v622 = vsel %vm101, %v602, %v609
    %v623 = vsel %vm101, %v604, %v611
    %v624 = vrot.slane %v549, 2
    %v625 = vrot.slane %v550, 2
    %v626 = vsel %vm202, %v624, %v625
    %v628 = vsel %vm558, %v549, %v626
    %629 = vrot.lane.b32.xlu0 %v570, 112
    %v630 = vpop.permute.xlu0 %629
    %631 = vrot.lane.b32.xlu0 %v568, 112
    %v632 = vpop.permute.xlu0 %631
    %635 = vrot.lane.b32.xlu0 %v581, 96
    %v636 = vpop.permute.xlu0 %635
    %637 = vrot.lane.b32.xlu0 %v578, 96
    %v638 = vpop.permute.xlu0 %637
    %641 = vrot.lane.b32.xlu0 %v585, 80
    %v642 = vpop.permute.xlu0 %641
    %643 = vrot.lane.b32.xlu0 %v583, 80
    %v644 = vpop.permute.xlu0 %643
    %648 = vrot.lane.b32.xlu0 %v628, 64
    %v649 = vpop.permute.xlu0 %648
    %650 = vrot.lane.b32.xlu0 %v625, 64
    %v651 = vpop.permute.xlu0 %650
    %v654 = vsel %vm614, %v565, %v630
    %v655 = vsel %vm614, %v550, %v632
    %v656 = vsel %vm104, %v630, %v636
    %v657 = vsel %vm104, %v632, %v638
    %v658 = vsel %vm619, %v636, %v642
    %v659 = vsel %vm619, %v638, %v644
    %v660 = vsel %vm101, %v642, %v649
    %v661 = vsel %vm101, %v644, %v651
    %v670 = vrot.slane %v654, 6
    %v671 = vrot.slane %v656, 6
    %v672 = vrot.slane %v658, 6
    %v673 = vrot.slane %v660, 6
    %v674 = vrot.slane %v649, 6
    %v675 = vrot.slane %v655, 6
    %v676 = vsel %vm231, %v670, %v675
    %v677 = vrot.slane %v657, 6
    %v678 = vsel %vm231, %v671, %v677
    %v679 = vrot.slane %v659, 6
    %v680 = vsel %vm231, %v672, %v679
    %v681 = vrot.slane %v661, 6
    %v682 = vsel %vm231, %v673, %v681
    %v683 = vrot.slane %v651, 6
    %v684 = vsel %vm231, %v674, %v683
    %v694 = vsel %vm231, %v616, %v670
    %v695 = vsel %vm231, %v618, %v671
    %v696 = vsel %vm231, %v621, %v672
    %v697 = vsel %vm231, %v623, %v673
    %v698 = vsel %vm231, %v611, %v674
    %v699 = vld [vmem:[%s3] sm:$0xff]
    %v700 = vld [vmem:[%s3 + $0x8] sm:$0xff]
    %v701 = vld [vmem:[%s3 + $0x10] sm:$0xff]
    %v702 = vld [vmem:[%s3 + $0x18] sm:$0xff]
    %v703 = vld [vmem:[%s3 + $0x20] sm:$0xff]
    %v704 = vld [vmem:[%s3 + $0x28] sm:$0xff]
    %v705 = vld [vmem:[%s3 + $0x30] sm:$0xff]
    %v706 = vld [vmem:[%s3 + $0x38] sm:$0xff]
    %v707 = vld [vmem:[%s3 + $0x40] sm:$0xff]
    %v708 = vld [vmem:[%s3 + $0x48] sm:$0xff]
    %v709 = vld [vmem:[%s3 + $0x50] sm:$0xff]
    %v710 = vld [vmem:[%s3 + $0x58] sm:$0xff]
    %v711 = vld [vmem:[%s3 + $0x60] sm:$0xff]
    %v712 = vld [vmem:[%s3 + $0x68] sm:$0xff]
    %v713 = vld [vmem:[%s3 + $0x70] sm:$0xff]
    %v714 = vld [vmem:[%s3 + $0x78] sm:$0xff]
    %v715 = vld [vmem:[%s3 + $0x80] sm:$0xff]
    %v716 = vld [vmem:[%s3 + $0x88] sm:$0xff]
    %v717 = vld [vmem:[%s3 + $0x90] sm:$0xff]
    %v718 = vld [vmem:[%s3 + $0x98] sm:$0xff]
    %v719 = vld [vmem:[%s3 + $0xa0] sm:$0xff]
    %v720 = vld [vmem:[%s3 + $0xa8] sm:$0xff]
    %v721 = vld [vmem:[%s3 + $0xb0] sm:$0xff]
    %v722 = vld [vmem:[%s3 + $0xb8] sm:$0xff]
    %v723 = vld [vmem:[%s3 + $0xc0] sm:$0xff]
    %v724 = vld [vmem:[%s3 + $0xc8] sm:$0xff]
    %v725 = vld [vmem:[%s3 + $0xd0] sm:$0xff]
    %v726 = vld [vmem:[%s3 + $0xd8] sm:$0xff]
    %v727 = vld [vmem:[%s3 + $0xe0] sm:$0xff]
    %v728 = vld [vmem:[%s3 + $0xe8] sm:$0xff]
    %v729 = vld [vmem:[%s3 + $0xf0] sm:$0xff]
    %v730 = vld [vmem:[%s3 + $0xf8] sm:$0xff]
    %v731 = vld [vmem:[%s3 + $0x100] sm:$0xff]
    %v732 = vld [vmem:[%s3 + $0x108] sm:$0xff]
    %v733 = vld [vmem:[%s3 + $0x110] sm:$0xff]
    %v734 = vld [vmem:[%s3 + $0x118] sm:$0xff]
    %v735 = vld [vmem:[%s3 + $0x120] sm:$0xff]
    %v736 = vld [vmem:[%s3 + $0x128] sm:$0xff]
    %v737 = vld [vmem:[%s3 + $0x130] sm:$0xff]
    %v738 = vld [vmem:[%s3 + $0x138] sm:$0xff]
    %v739 = vld [vmem:[%s3 + $0x140] sm:$0xff]
    %v740 = vld [vmem:[%s3 + $0x148] sm:$0xff]
    %v741 = vld [vmem:[%s3 + $0x150] sm:$0xff]
    %v742 = vld [vmem:[%s3 + $0x158] sm:$0xff]
    %v743 = vld [vmem:[%s3 + $0x160] sm:$0xff]
    %v744 = vld [vmem:[%s3 + $0x168] sm:$0xff]
    %v745 = vld [vmem:[%s3 + $0x170] sm:$0xff]
    %v746 = vld [vmem:[%s3 + $0x178] sm:$0xff]
    %v747 = vld [vmem:[%s3 + $0x180] sm:$0xff]
    %v748 = vld [vmem:[%s3 + $0x188] sm:$0xff]
    %v749 = vld [vmem:[%s3 + $0x190] sm:$0xff]
    %v750 = vld [vmem:[%s3 + $0x198] sm:$0xff]
    %v751 = vld [vmem:[%s3 + $0x1a0] sm:$0xff]
    %v752 = vld [vmem:[%s3 + $0x1a8] sm:$0xff]
    %v753 = vld [vmem:[%s3 + $0x1b0] sm:$0xff]
    %v754 = vld [vmem:[%s3 + $0x1b8] sm:$0xff]
    %v755 = vld [vmem:[%s3 + $0x1c0] sm:$0xff]
    %v756 = vld [vmem:[%s3 + $0x1c8] sm:$0xff]
    %v757 = vld [vmem:[%s3 + $0x1d0] sm:$0xff]
    %v758 = vld [vmem:[%s3 + $0x1d8] sm:$0xff]
    %v759 = vld [vmem:[%s3 + $0x1e0] sm:$0xff]
    %v760 = vld [vmem:[%s3 + $0x1e8] sm:$0xff]
    %v761 = vld [vmem:[%s3 + $0x1f0] sm:$0xff]
    %v762 = vld [vmem:[%s3 + $0x1f8] sm:$0xff]
    %v763 = vld [vmem:[%s3 + $0x200] sm:$0xff]
    %v764 = vld [vmem:[%s3 + $0x208] sm:$0xff]
    %v765 = vld [vmem:[%s3 + $0x210] sm:$0xff]
    %v766 = vld [vmem:[%s3 + $0x218] sm:$0xff]
    %v767 = vld [vmem:[%s3 + $0x220] sm:$0xff]
    %v768 = vld [vmem:[%s3 + $0x228] sm:$0xff]
    %v769 = vld [vmem:[%s3 + $0x230] sm:$0xff]
    %v770 = vld [vmem:[%s3 + $0x238] sm:$0xff]
    %v771 = vld [vmem:[%s3 + $0x240] sm:$0xff]
    %v772 = vld [vmem:[%s3 + $0x248] sm:$0xff]
    %v773 = vld [vmem:[%s3 + $0x250] sm:$0xff]
    %v774 = vld [vmem:[%s3 + $0x258] sm:$0xff]
    %v775 = vld [vmem:[%s3 + $0x260] sm:$0xff]
    %v776 = vld [vmem:[%s3 + $0x268] sm:$0xff]
    %v777 = vld [vmem:[%s3 + $0x270] sm:$0xff]
    %v778 = vld [vmem:[%s3 + $0x278] sm:$0xff]
    %v779 = vld [vmem:[%s3 + $0x280] sm:$0xff]
    %v780 = vld [vmem:[%s3 + $0x288] sm:$0xff]
    %v781 = vld [vmem:[%s3 + $0x290] sm:$0xff]
    %v782 = vld [vmem:[%s3 + $0x298] sm:$0xff]
    %v783 = vld [vmem:[%s3 + $0x2a0] sm:$0xff]
    %v784 = vld [vmem:[%s3 + $0x2a8] sm:$0xff]
    %v785 = vld [vmem:[%s3 + $0x2b0] sm:$0xff]
    %v786 = vld [vmem:[%s3 + $0x2b8] sm:$0xff]
    %v787 = vld [vmem:[%s3 + $0x2c0] sm:$0xff]
    %v788 = vld [vmem:[%s3 + $0x2c8] sm:$0xff]
    %v789 = vld [vmem:[%s3 + $0x2d0] sm:$0xff]
    %v790 = vld [vmem:[%s3 + $0x2d8] sm:$0xff]
    %v791 = vld [vmem:[%s3 + $0x2e0] sm:$0xff]
    %v792 = vld [vmem:[%s3 + $0x2e8] sm:$0xff]
    %v793 = vld [vmem:[%s3 + $0x2f0] sm:$0xff]
    %v794 = vld [vmem:[%s3 + $0x2f8] sm:$0xff]
    %v795 = vld [vmem:[%s3 + $0x300] sm:$0xff]
    %v796 = vld [vmem:[%s3 + $0x308] sm:$0xff]
    %v797 = vld [vmem:[%s3 + $0x310] sm:$0xff]
    %v798 = vld [vmem:[%s3 + $0x318] sm:$0xff]
    %v799 = vld [vmem:[%s3 + $0x320] sm:$0xff]
    %v800 = vld [vmem:[%s3 + $0x328] sm:$0xff]
    %v801 = vld [vmem:[%s3 + $0x330] sm:$0xff]
    %v802 = vld [vmem:[%s3 + $0x338] sm:$0xff]
    %v803 = vld [vmem:[%s3 + $0x340] sm:$0xff]
    %v804 = vld [vmem:[%s3 + $0x348] sm:$0xff]
    %v805 = vld [vmem:[%s3 + $0x350] sm:$0xff]
    %v806 = vld [vmem:[%s3 + $0x358] sm:$0xff]
    %v807 = vld [vmem:[%s3 + $0x360] sm:$0xff]
    %v808 = vld [vmem:[%s3 + $0x368] sm:$0xff]
    %v809 = vld [vmem:[%s3 + $0x370] sm:$0xff]
    %v810 = vld [vmem:[%s3 + $0x378] sm:$0xff]
    %v811 = vld [vmem:[%s3 + $0x380] sm:$0xff]
    %v812 = vld [vmem:[%s3 + $0x388] sm:$0xff]
    %v813 = vld [vmem:[%s3 + $0x390] sm:$0xff]
    %v814 = vld [vmem:[%s3 + $0x398] sm:$0xff]
    %v815 = vld [vmem:[%s3 + $0x3a0] sm:$0xff]
    %v816 = vld [vmem:[%s3 + $0x3a8] sm:$0xff]
    %v817 = vld [vmem:[%s3 + $0x3b0] sm:$0xff]
    %v818 = vld [vmem:[%s3 + $0x3b8] sm:$0xff]
    %v819 = vld [vmem:[%s3 + $0x3c0] sm:$0xff]
    %v820 = vld [vmem:[%s3 + $0x3c8] sm:$0xff]
    %v821 = vld [vmem:[%s3 + $0x3d0] sm:$0xff]
    %v822 = vld [vmem:[%s3 + $0x3d8] sm:$0xff]
    %v823 = vld [vmem:[%s3 + $0x3e0] sm:$0xff]
    %v824 = vld [vmem:[%s3 + $0x3e8] sm:$0xff]
    %v825 = vld [vmem:[%s3 + $0x3f0] sm:$0xff]
    %v826 = vld [vmem:[%s3 + $0x3f8] sm:$0xff]
    %v827 = vld [vmem:[%s3 + $0x400] sm:$0xff]
    %v828 = vld [vmem:[%s3 + $0x408] sm:$0xff]
    %v829 = vld [vmem:[%s3 + $0x410] sm:$0xff]
    %v830 = vld [vmem:[%s3 + $0x418] sm:$0xff]
    %v831 = vld [vmem:[%s3 + $0x420] sm:$0xff]
    %v832 = vld [vmem:[%s3 + $0x428] sm:$0xff]
    %v833 = vld [vmem:[%s3 + $0x430] sm:$0xff]
    %v834 = vld [vmem:[%s3 + $0x438] sm:$0xff]
    %v835 = vld [vmem:[%s3 + $0x440] sm:$0xff]
    %v836 = vld [vmem:[%s3 + $0x448] sm:$0xff]
    %v837 = vld [vmem:[%s3 + $0x450] sm:$0xff]
    %v838 = vld [vmem:[%s3 + $0x458] sm:$0xff]
    %v839 = vld [vmem:[%s4] sm:$0x3]
    %v841 = vperm.slane %v839, 0
    %v842 = vperm.slane %v839, 1
    %vm845 = vcmask 392192
    %v846 = vsel %vm845, %v609, 0
    %v849 = vsel %vm845, %v698, 0
    %v851 = vsel %vm845, %v684, 0
    %853 = vmatpush.msra.mxu0 %v729
    %854 = vmatpush.msra.mxu0 %v727
    %855 = vmatpush.msra.mxu0 %v725
    %856 = vmatpush.msra.mxu0 %v723
    %857 = vmatpush.msra.mxu0 %v721
    %858 = vmatpush.msra.mxu0 %v719
    %859 = vmatpush.msra.mxu0 %v717
    %860 = vmatpush.msra.mxu0 %v715
    %861 = vmatpush.msra.mxu0 %v713
    %862 = vmatpush.msra.mxu0 %v711
    %863 = vmatpush.msra.mxu0 %v709
    %864 = vmatpush.msra.mxu0 %v707
    %865 = vmatpush.msra.mxu0 %v705
    %866 = vmatpush.msra.mxu0 %v703
    %867 = vmatpush.msra.mxu0 %v701
    %868 = vmatpush.msra.mxu0 %v699
    %869 = vmatmul.f32.gmra.mxu0 %v615
    %v870 = vpop.f32.mrf.mxu0
    %v871 = vadd.f32 %v841, %v870
    %872 = vmatmul.f32.gmra.mxu0 %v694
    %v873 = vpop.f32.mrf.mxu0
    %v874 = vadd.f32 %v841, %v873
    %875 = vmatmul.f32.gmra.mxu0 %v676
    %v876 = vpop.f32.mrf.mxu0
    %v877 = vadd.f32 %v841, %v876
    %878 = vdwg.mxu0
    %879 = vmatpush.msra.mxu0 %v761
    %880 = vmatpush.msra.mxu0 %v759
    %881 = vmatpush.msra.mxu0 %v757
    %882 = vmatpush.msra.mxu0 %v755
    %883 = vmatpush.msra.mxu0 %v753
    %884 = vmatpush.msra.mxu0 %v751
    %885 = vmatpush.msra.mxu0 %v749
    %886 = vmatpush.msra.mxu0 %v747
    %887 = vmatpush.msra.mxu0 %v745
    %888 = vmatpush.msra.mxu0 %v743
    %889 = vmatpush.msra.mxu0 %v741
    %890 = vmatpush.msra.mxu0 %v739
    %891 = vmatpush.msra.mxu0 %v737
    %892 = vmatpush.msra.mxu0 %v735
    %893 = vmatpush.msra.mxu0 %v733
    %894 = vmatpush.msra.mxu0 %v731
    %895 = vmatmul.f32.gmra.mxu0 %v617
    %v896 = vpop.f32.mrf.mxu0
    %v897 = vadd.f32 %v871, %v896
    %898 = vmatmul.f32.gmra.mxu0 %v695
    %v899 = vpop.f32.mrf.mxu0
    %v900 = vadd.f32 %v874, %v899
    %901 = vmatmul.f32.gmra.mxu0 %v678
    %v902 = vpop.f32.mrf.mxu0
    %v903 = vadd.f32 %v877, %v902
    %904 = vdwg.mxu0
    %905 = vmatpush.msra.mxu0 %v793
    %906 = vmatpush.msra.mxu0 %v791
    %907 = vmatpush.msra.mxu0 %v789
    %908 = vmatpush.msra.mxu0 %v787
    %909 = vmatpush.msra.mxu0 %v785
    %910 = vmatpush.msra.mxu0 %v783
    %911 = vmatpush.msra.mxu0 %v781
    %912 = vmatpush.msra.mxu0 %v779
    %913 = vmatpush.msra.mxu0 %v777
    %914 = vmatpush.msra.mxu0 %v775
    %915 = vmatpush.msra.mxu0 %v773
    %916 = vmatpush.msra.mxu0 %v771
    %917 = vmatpush.msra.mxu0 %v769
    %918 = vmatpush.msra.mxu0 %v767
    %919 = vmatpush.msra.mxu0 %v765
    %920 = vmatpush.msra.mxu0 %v763
    %921 = vmatmul.f32.gmra.mxu0 %v620
    %v922 = vpop.f32.mrf.mxu0
    %v923 = vadd.f32 %v897, %v922
    %924 = vmatmul.f32.gmra.mxu0 %v696
    %v925 = vpop.f32.mrf.mxu0
    %v926 = vadd.f32 %v900, %v925
    %927 = vmatmul.f32.gmra.mxu0 %v680
    %v928 = vpop.f32.mrf.mxu0
    %v929 = vadd.f32 %v903, %v928
    %930 = vdwg.mxu0
    %931 = vmatpush.msra.mxu0 %v825
    %932 = vmatpush.msra.mxu0 %v823
    %933 = vmatpush.msra.mxu0 %v821
    %934 = vmatpush.msra.mxu0 %v819
    %935 = vmatpush.msra.mxu0 %v817
    %936 = vmatpush.msra.mxu0 %v815
    %937 = vmatpush.msra.mxu0 %v813
    %938 = vmatpush.msra.mxu0 %v811
    %939 = vmatpush.msra.mxu0 %v809
    %940 = vmatpush.msra.mxu0 %v807
    %941 = vmatpush.msra.mxu0 %v805
    %942 = vmatpush.msra.mxu0 %v803
    %943 = vmatpush.msra.mxu0 %v801
    %944 = vmatpush.msra.mxu0 %v799
    %945 = vmatpush.msra.mxu0 %v797
    %946 = vmatpush.msra.mxu0 %v795
    %947 = vmatmul.f32.gmra.mxu0 %v622
    %v948 = vpop.f32.mrf.mxu0
    %v949 = vadd.f32 %v923, %v948
    %950 = vmatmul.f32.gmra.mxu0 %v697
    %v951 = vpop.f32.mrf.mxu0
    %v952 = vadd.f32 %v926, %v951
    %953 = vmatmul.f32.gmra.mxu0 %v682
    %v954 = vpop.f32.mrf.mxu0
    %v955 = vadd.f32 %v929, %v954
    %956 = vdwg.mxu0
    %957 = vmatpush.msra.mxu0 0.0
    %958 = vmatpush.msra.mxu0 0.0
    %959 = vmatpush.msra.mxu0 0.0
    %960 = vmatpush.msra.mxu0 0.0
    %961 = vmatpush.msra.mxu0 0.0
    %962 = vmatpush.msra.mxu0 0.0
    %963 = vmatpush.msra.mxu0 0.0
    %964 = vmatpush.msra.mxu0 0.0
    %965 = vmatpush.msra.mxu0 0.0
    %966 = vmatpush.msra.mxu0 0.0
    %967 = vmatpush.msra.mxu0 %v837
    %968 = vmatpush.msra.mxu0 %v835
    %969 = vmatpush.msra.mxu0 %v833
    %970 = vmatpush.msra.mxu0 %v831
    %971 = vmatpush.msra.mxu0 %v829
    %972 = vmatpush.msra.mxu0 %v827
    %973 = vmatmul.f32.gmra.mxu0 %v846
    %v974 = vpop.f32.mrf.mxu0
    %v975 = vadd.f32 %v949, %v974
    %976 = vmatmul.f32.gmra.mxu0 %v849
    %v977 = vpop.f32.mrf.mxu0
    %v978 = vadd.f32 %v952, %v977
    %979 = vmatmul.f32.gmra.mxu0 %v851
    %v980 = vpop.f32.mrf.mxu0
    %v981 = vadd.f32 %v955, %v980
    %982 = vdwg.mxu0
    %983 = vmatpush.msra.mxu0 %v730
    %984 = vmatpush.msra.mxu0 %v728
    %985 = vmatpush.msra.mxu0 %v726
    %986 = vmatpush.msra.mxu0 %v724
    %987 = vmatpush.msra.mxu0 %v722
    %988 = vmatpush.msra.mxu0 %v720
    %989 = vmatpush.msra.mxu0 %v718
    %990 = vmatpush.msra.mxu0 %v716
    %991 = vmatpush.msra.mxu0 %v714
    %992 = vmatpush.msra.mxu0 %v712
    %993 = vmatpush.msra.mxu0 %v710
    %994 = vmatpush.msra.mxu0 %v708
    %995 = vmatpush.msra.mxu0 %v706
    %996 = vmatpush.msra.mxu0 %v704
    %997 = vmatpush.msra.mxu0 %v702
    %998 = vmatpush.msra.mxu0 %v700
    %999 = vmatmul.f32.gmra.mxu0 %v615
    %v1000 = vpop.f32.mrf.mxu0
    %v1001 = vadd.f32 %v842, %v1000
    %1002 = vmatmul.f32.gmra.mxu0 %v694
    %v1003 = vpop.f32.mrf.mxu0
    %v1004 = vadd.f32 %v842, %v1003
    %1005 = vmatmul.f32.gmra.mxu0 %v676
    %v1006 = vpop.f32.mrf.mxu0
    %v1007 = vadd.f32 %v842, %v1006
    %1008 = vdwg.mxu0
    %1009 = vmatpush.msra.mxu0 %v762
    %1010 = vmatpush.msra.mxu0 %v760
    %1011 = vmatpush.msra.mxu0 %v758
    %1012 = vmatpush.msra.mxu0 %v756
    %1013 = vmatpush.msra.mxu0 %v754
    %1014 = vmatpush.msra.mxu0 %v752
    %1015 = vmatpush.msra.mxu0 %v750
    %1016 = vmatpush.msra.mxu0 %v748
    %1017 = vmatpush.msra.mxu0 %v746
    %1018 = vmatpush.msra.mxu0 %v744
    %1019 = vmatpush.msra.mxu0 %v742
    %1020 = vmatpush.msra.mxu0 %v740
    %1021 = vmatpush.msra.mxu0 %v738
    %1022 = vmatpush.msra.mxu0 %v736
    %1023 = vmatpush.msra.mxu0 %v734
    %1024 = vmatpush.msra.mxu0 %v732
    %1025 = vmatmul.f32.gmra.mxu0 %v617
    %v1026 = vpop.f32.mrf.mxu0
    %v1027 = vadd.f32 %v1001, %v1026
    %1028 = vmatmul.f32.gmra.mxu0 %v695
    %v1029 = vpop.f32.mrf.mxu0
    %v1030 = vadd.f32 %v1004, %v1029
    %1031 = vmatmul.f32.gmra.mxu0 %v678
    %v1032 = vpop.f32.mrf.mxu0
    %v1033 = vadd.f32 %v1007, %v1032
    %1034 = vdwg.mxu0
    %1035 = vmatpush.msra.mxu0 %v794
    %1036 = vmatpush.msra.mxu0 %v792
    %1037 = vmatpush.msra.mxu0 %v790
    %1038 = vmatpush.msra.mxu0 %v788
    %1039 = vmatpush.msra.mxu0 %v786
    %1040 = vmatpush.msra.mxu0 %v784
    %1041 = vmatpush.msra.mxu0 %v782
    %1042 = vmatpush.msra.mxu0 %v780
    %1043 = vmatpush.msra.mxu0 %v778
    %1044 = vmatpush.msra.mxu0 %v776
    %1045 = vmatpush.msra.mxu0 %v774
    %1046 = vmatpush.msra.mxu0 %v772
    %1047 = vmatpush.msra.mxu0 %v770
    %1048 = vmatpush.msra.mxu0 %v768
    %1049 = vmatpush.msra.mxu0 %v766
    %1050 = vmatpush.msra.mxu0 %v764
    %1051 = vmatmul.f32.gmra.mxu0 %v620
    %v1052 = vpop.f32.mrf.mxu0
    %v1053 = vadd.f32 %v1027, %v1052
    %1054 = vmatmul.f32.gmra.mxu0 %v696
    %v1055 = vpop.f32.mrf.mxu0
    %v1056 = vadd.f32 %v1030, %v1055
    %1057 = vmatmul.f32.gmra.mxu0 %v680
    %v1058 = vpop.f32.mrf.mxu0
    %v1059 = vadd.f32 %v1033, %v1058
    %1060 = vdwg.mxu0
    %1061 = vmatpush.msra.mxu0 %v826
    %1062 = vmatpush.msra.mxu0 %v824
    %1063 = vmatpush.msra.mxu0 %v822
    %1064 = vmatpush.msra.mxu0 %v820
    %1065 = vmatpush.msra.mxu0 %v818
    %1066 = vmatpush.msra.mxu0 %v816
    %1067 = vmatpush.msra.mxu0 %v814
    %1068 = vmatpush.msra.mxu0 %v812
    %1069 = vmatpush.msra.mxu0 %v810
    %1070 = vmatpush.msra.mxu0 %v808
    %1071 = vmatpush.msra.mxu0 %v806
    %1072 = vmatpush.msra.mxu0 %v804
    %1073 = vmatpush.msra.mxu0 %v802
    %1074 = vmatpush.msra.mxu0 %v800
    %1075 = vmatpush.msra.mxu0 %v798
    %1076 = vmatpush.msra.mxu0 %v796
    %1077 = vmatmul.f32.gmra.mxu0 %v622
    %v1078 = vpop.f32.mrf.mxu0
    %v1079 = vadd.f32 %v1053, %v1078
    %1080 = vmatmul.f32.gmra.mxu0 %v697
    %v1081 = vpop.f32.mrf.mxu0
    %v1082 = vadd.f32 %v1056, %v1081
    %1083 = vmatmul.f32.gmra.mxu0 %v682
    %v1084 = vpop.f32.mrf.mxu0
    %v1085 = vadd.f32 %v1059, %v1084
    %1086 = vdwg.mxu0
    %1087 = vmatpush.msra.mxu0 0.0
    %1088 = vmatpush.msra.mxu0 0.0
    %1089 = vmatpush.msra.mxu0 0.0
    %1090 = vmatpush.msra.mxu0 0.0
    %1091 = vmatpush.msra.mxu0 0.0
    %1092 = vmatpush.msra.mxu0 0.0
    %1093 = vmatpush.msra.mxu0 0.0
    %1094 = vmatpush.msra.mxu0 0.0
    %1095 = vmatpush.msra.mxu0 0.0
    %1096 = vmatpush.msra.mxu0 0.0
    %1097 = vmatpush.msra.mxu0 %v838
    %1098 = vmatpush.msra.mxu0 %v836
    %1099 = vmatpush.msra.mxu0 %v834
    %1100 = vmatpush.msra.mxu0 %v832
    %1101 = vmatpush.msra.mxu0 %v830
    %1102 = vmatpush.msra.mxu0 %v828
    %1103 = vmatmul.f32.gmra.mxu0 %v846
    %v1104 = vpop.f32.mrf.mxu0
    %v1105 = vadd.f32 %v1079, %v1104
    %1106 = vmatmul.f32.gmra.mxu0 %v849
    %v1107 = vpop.f32.mrf.mxu0
    %v1108 = vadd.f32 %v1082, %v1107
    %1109 = vmatmul.f32.gmra.mxu0 %v851
    %v1110 = vpop.f32.mrf.mxu0
    %v1111 = vadd.f32 %v1085, %v1110
    %1112 = vdwg.mxu0
    %v1113 = vmax.f32 %v975, 0.0
    %v1114 = vmax.f32 %v1105, 0.0
    %v1115 = vmax.f32 %v978, 0.0
    %v1116 = vmax.f32 %v1108, 0.0
    %v1117 = vmax.f32 %v981, 0.0
    %v1118 = vmax.f32 %v1111, 0.0
    %v1123 = vrot.slane %v1115, 2
    %v1124 = vrot.slane %v1117, 2
    %v1125 = vsel %vm202, %v1123, %v1124
    %v1126 = vrot.slane %v1116, 2
    %v1127 = vrot.slane %v1118, 2
    %v1128 = vsel %vm202, %v1126, %v1127
    %v1133 = vmax.f32 %v1113, %v1125
    %v1134 = vmax.f32 %v1114, %v1128
    %v1135 = vmax.f32 %v1115, %v1124
    %v1136 = vmax.f32 %v1116, %v1127
    %1141 = vrot.lane.b32.xlu0 %v1133, 48
    %v1142 = vpop.permute.xlu0 %1141
    %1143 = vrot.lane.b32.xlu0 %v1134, 48
    %v1144 = vpop.permute.xlu0 %1143
    %1145 = vrot.lane.b32.xlu0 %v1135, 48
    %v1146 = vpop.permute.xlu0 %1145
    %1147 = vrot.lane.b32.xlu0 %v1136, 48
    %v1148 = vpop.permute.xlu0 %1147
    %v1149 = vsel %vm845, %v1142, %v1144
    %v1150 = vsel %vm845, %v1146, %v1148
    %v1153 = vmax.f32 %v1133, %v1149
    %v1154 = vmax.f32 %v1135, %v1150
    %v1156 = vrot.slane %v1153, 1
    %1157 = vrot.lane.b32.xlu0 %v1156, 80
    %v1158 = vpop.permute.xlu0 %1157
    %v1160 = vrot.slane %v1153, 2
    %1161 = vrot.lane.b32.xlu0 %v1160, 32
    %v1162 = vpop.permute.xlu0 %1161
    %v1164 = vrot.slane %v1153, 3
    %1165 = vrot.lane.b32.xlu0 %v1164, 112
    %v1166 = vpop.permute.xlu0 %1165
    %v1168 = vrot.slane %v1153, 4
    %1169 = vrot.lane.b32.xlu0 %v1168, 64
    %v1170 = vpop.permute.xlu0 %1169
    %v1172 = vsel %vm619, %v1153, %v1158
    %v1173 = vsel %vm98, %v1158, %v1162
    %v1174 = vsel %vm614, %v1173, %v1166
    %v1175 = vsel %vm101, %v1166, %v1170
    %v1177 = vrot.slane %v1154, 3
    %1178 = vrot.lane.b32.xlu0 %v1177, 112
    %v1179 = vpop.permute.xlu0 %1178
    %v1181 = vrot.slane %v1154, 4
    %1182 = vrot.lane.b32.xlu0 %v1181, 64
    %v1183 = vpop.permute.xlu0 %1182
    %v1185 = vsel %vm614, %v1173, %v1179
    %v1186 = vsel %vm101, %v1179, %v1183
    %v1190 = vrot.slane %v1172, 4
    %v1191 = vrot.slane %v1185, 4
    %v1192 = vrot.slane %v1186, 4
    %v1193 = vrot.slane %v1183, 4
    %v1198 = vsel %vm571, %v1172, %v1190
    %v1199 = vsel %vm571, %v1174, %v1191
    %v1200 = vsel %vm571, %v1175, %v1192
    %v1201 = vsel %vm571, %v1170, %v1193
    %v1202 = vld [vmem:[%s5] sm:$0xff]
    %v1203 = vld [vmem:[%s5 + $0x8] sm:$0xff]
    %v1204 = vld [vmem:[%s5 + $0x10] sm:$0xff]
    %v1205 = vld [vmem:[%s5 + $0x18] sm:$0xff]
    %v1206 = vld [vmem:[%s5 + $0x20] sm:$0xff]
    %v1207 = vld [vmem:[%s5 + $0x28] sm:$0xff]
    %v1208 = vld [vmem:[%s5 + $0x30] sm:$0xff]
    %v1209 = vld [vmem:[%s5 + $0x38] sm:$0xff]
    %v1210 = vld [vmem:[%s5 + $0x40] sm:$0xff]
    %v1211 = vld [vmem:[%s5 + $0x48] sm:$0xff]
    %v1212 = vld [vmem:[%s5 + $0x50] sm:$0xff]
    %v1213 = vld [vmem:[%s5 + $0x58] sm:$0xff]
    %v1214 = vld [vmem:[%s5 + $0x60] sm:$0xff]
    %v1215 = vld [vmem:[%s5 + $0x68] sm:$0xff]
    %v1216 = vld [vmem:[%s5 + $0x70] sm:$0xff]
    %v1217 = vld [vmem:[%s5 + $0x78] sm:$0xff]
    %v1218 = vld [vmem:[%s5 + $0x80] sm:$0xff]
    %v1219 = vld [vmem:[%s5 + $0x88] sm:$0xff]
    %v1220 = vld [vmem:[%s5 + $0x90] sm:$0xff]
    %v1221 = vld [vmem:[%s5 + $0x98] sm:$0xff]
    %v1222 = vld [vmem:[%s5 + $0xa0] sm:$0xff]
    %v1223 = vld [vmem:[%s5 + $0xa8] sm:$0xff]
    %v1224 = vld [vmem:[%s5 + $0xb0] sm:$0xff]
    %v1225 = vld [vmem:[%s5 + $0xb8] sm:$0xff]
    %v1226 = vld [vmem:[%s5 + $0xc0] sm:$0xff]
    %v1227 = vld [vmem:[%s5 + $0xc8] sm:$0xff]
    %v1228 = vld [vmem:[%s5 + $0xd0] sm:$0xff]
    %v1229 = vld [vmem:[%s5 + $0xd8] sm:$0xff]
    %v1230 = vld [vmem:[%s5 + $0xe0] sm:$0xff]
    %v1231 = vld [vmem:[%s5 + $0xe8] sm:$0xff]
    %v1232 = vld [vmem:[%s5 + $0xf0] sm:$0xff]
    %v1233 = vld [vmem:[%s5 + $0xf8] sm:$0xff]
    %v1234 = vld [vmem:[%s5 + $0x100] sm:$0xff]
    %v1235 = vld [vmem:[%s5 + $0x108] sm:$0xff]
    %v1236 = vld [vmem:[%s5 + $0x110] sm:$0xff]
    %v1237 = vld [vmem:[%s5 + $0x118] sm:$0xff]
    %v1238 = vld [vmem:[%s5 + $0x120] sm:$0xff]
    %v1239 = vld [vmem:[%s5 + $0x128] sm:$0xff]
    %v1240 = vld [vmem:[%s5 + $0x130] sm:$0xff]
    %v1241 = vld [vmem:[%s5 + $0x138] sm:$0xff]
    %v1242 = vld [vmem:[%s5 + $0x140] sm:$0xff]
    %v1243 = vld [vmem:[%s5 + $0x148] sm:$0xff]
    %v1244 = vld [vmem:[%s5 + $0x150] sm:$0xff]
    %v1245 = vld [vmem:[%s5 + $0x158] sm:$0xff]
    %v1246 = vld [vmem:[%s5 + $0x160] sm:$0xff]
    %v1247 = vld [vmem:[%s5 + $0x168] sm:$0xff]
    %v1248 = vld [vmem:[%s5 + $0x170] sm:$0xff]
    %v1249 = vld [vmem:[%s5 + $0x178] sm:$0xff]
    %v1250 = vld [vmem:[%s5 + $0x180] sm:$0xff]
    %v1251 = vld [vmem:[%s5 + $0x188] sm:$0xff]
    %v1252 = vld [vmem:[%s6] sm:$0x1]
    %v1254 = vperm.slane %v1252, 0
    %v1257 = vsel %vm538, %v1201, 0
    %1259 = vmatpush.msra.mxu0 %v1217
    %1260 = vmatpush.msra.mxu0 %v1216
    %1261 = vmatpush.msra.mxu0 %v1215
    %1262 = vmatpush.msra.mxu0 %v1214
    %1263 = vmatpush.msra.mxu0 %v1213
    %1264 = vmatpush.msra.mxu0 %v1212
    %1265 = vmatpush.msra.mxu0 %v1211
    %1266 = vmatpush.msra.mxu0 %v1210
    %1267 = vmatpush.msra.mxu0 %v1209
    %1268 = vmatpush.msra.mxu0 %v1208
    %1269 = vmatpush.msra.mxu0 %v1207
    %1270 = vmatpush.msra.mxu0 %v1206
    %1271 = vmatpush.msra.mxu0 %v1205
    %1272 = vmatpush.msra.mxu0 %v1204
    %1273 = vmatpush.msra.mxu0 %v1203
    %1274 = vmatpush.msra.mxu0 %v1202
    %1275 = vmatmul.f32.gmra.mxu0 %v1198
    %v1276 = vpop.f32.mrf.mxu0
    %v1277 = vadd.f32 %v1254, %v1276
    %1278 = vdwg.mxu0
    %1279 = vmatpush.msra.mxu0 %v1233
    %1280 = vmatpush.msra.mxu0 %v1232
    %1281 = vmatpush.msra.mxu0 %v1231
    %1282 = vmatpush.msra.mxu0 %v1230
    %1283 = vmatpush.msra.mxu0 %v1229
    %1284 = vmatpush.msra.mxu0 %v1228
    %1285 = vmatpush.msra.mxu0 %v1227
    %1286 = vmatpush.msra.mxu0 %v1226
    %1287 = vmatpush.msra.mxu0 %v1225
    %1288 = vmatpush.msra.mxu0 %v1224
    %1289 = vmatpush.msra.mxu0 %v1223
    %1290 = vmatpush.msra.mxu0 %v1222
    %1291 = vmatpush.msra.mxu0 %v1221
    %1292 = vmatpush.msra.mxu0 %v1220
    %1293 = vmatpush.msra.mxu0 %v1219
    %1294 = vmatpush.msra.mxu0 %v1218
    %1295 = vmatmul.f32.gmra.mxu0 %v1199
    %v1296 = vpop.f32.mrf.mxu0
    %v1297 = vadd.f32 %v1277, %v1296
    %1298 = vdwg.mxu0
    %1299 = vmatpush.msra.mxu0 %v1249
    %1300 = vmatpush.msra.mxu0 %v1248
    %1301 = vmatpush.msra.mxu0 %v1247
    %1302 = vmatpush.msra.mxu0 %v1246
    %1303 = vmatpush.msra.mxu0 %v1245
    %1304 = vmatpush.msra.mxu0 %v1244
    %1305 = vmatpush.msra.mxu0 %v1243
    %1306 = vmatpush.msra.mxu0 %v1242
    %1307 = vmatpush.msra.mxu0 %v1241
    %1308 = vmatpush.msra.mxu0 %v1240
    %1309 = vmatpush.msra.mxu0 %v1239
    %1310 = vmatpush.msra.mxu0 %v1238
    %1311 = vmatpush.msra.mxu0 %v1237
    %1312 = vmatpush.msra.mxu0 %v1236
    %1313 = vmatpush.msra.mxu0 %v1235
    %1314 = vmatpush.msra.mxu0 %v1234
    %1315 = vmatmul.f32.gmra.mxu0 %v1200
    %v1316 = vpop.f32.mrf.mxu0
    %v1317 = vadd.f32 %v1297, %v1316
    %1318 = vdwg.mxu0
    %1319 = vmatpush.msra.mxu0 0.0
    %1320 = vmatpush.msra.mxu0 0.0
    %1321 = vmatpush.msra.mxu0 0.0
    %1322 = vmatpush.msra.mxu0 0.0
    %1323 = vmatpush.msra.mxu0 0.0
    %1324 = vmatpush.msra.mxu0 0.0
    %1325 = vmatpush.msra.mxu0 0.0
    %1326 = vmatpush.msra.mxu0 0.0
    %1327 = vmatpush.msra.mxu0 0.0
    %1328 = vmatpush.msra.mxu0 0.0
    %1329 = vmatpush.msra.mxu0 0.0
    %1330 = vmatpush.msra.mxu0 0.0
    %1331 = vmatpush.msra.mxu0 0.0
    %1332 = vmatpush.msra.mxu0 0.0
    %1333 = vmatpush.msra.mxu0 %v1251
    %1334 = vmatpush.msra.mxu0 %v1250
    %1335 = vmatmul.f32.gmra.mxu0 %v1257
    %v1336 = vpop.f32.mrf.mxu0
    %v1337 = vadd.f32 %v1317, %v1336
    %1338 = vdwg.mxu0
    %v1339 = vmax.f32 %v1337, 0.0
    %v1340 = vld [vmem:[%s7] sm:$0xff]
    %v1341 = vld [vmem:[%s7 + $0x8] sm:$0xff]
    %v1342 = vld [vmem:[%s7 + $0x10] sm:$0xff]
    %v1343 = vld [vmem:[%s7 + $0x18] sm:$0xff]
    %v1344 = vld [vmem:[%s7 + $0x20] sm:$0xff]
    %v1345 = vld [vmem:[%s7 + $0x28] sm:$0xff]
    %v1346 = vld [vmem:[%s7 + $0x30] sm:$0xff]
    %v1347 = vld [vmem:[%s7 + $0x38] sm:$0xff]
    %v1348 = vld [vmem:[%s7 + $0x40] sm:$0xff]
    %v1349 = vld [vmem:[%s7 + $0x48] sm:$0xff]
    %v1350 = vld [vmem:[%s7 + $0x50] sm:$0xff]
    %v1351 = vld [vmem:[%s7 + $0x58] sm:$0xff]
    %v1352 = vld [vmem:[%s7 + $0x60] sm:$0xff]
    %v1353 = vld [vmem:[%s7 + $0x68] sm:$0xff]
    %v1354 = vld [vmem:[%s7 + $0x70] sm:$0xff]
    %v1355 = vld [vmem:[%s7 + $0x78] sm:$0xff]
    %v1356 = vld [vmem:[%s8] sm:$0x1]
    %v1358 = vperm.slane %v1356, 0
    %1360 = vmatpush.msra.mxu0 %v1355
    %1361 = vmatpush.msra.mxu0 %v1354
    %1362 = vmatpush.msra.mxu0 %v1353
    %1363 = vmatpush.msra.mxu0 %v1352
    %1364 = vmatpush.msra.mxu0 %v1351
    %1365 = vmatpush.msra.mxu0 %v1350
    %1366 = vmatpush.msra.mxu0 %v1349
    %1367 = vmatpush.msra.mxu0 %v1348
    %1368 = vmatpush.msra.mxu0 %v1347
    %1369 = vmatpush.msra.mxu0 %v1346
    %1370 = vmatpush.msra.mxu0 %v1345
    %1371 = vmatpush.msra.mxu0 %v1344
    %1372 = vmatpush.msra.mxu0 %v1343
    %1373 = vmatpush.msra.mxu0 %v1342
    %1374 = vmatpush.msra.mxu0 %v1341
    %1375 = vmatpush.msra.mxu0 %v1340
    %1376 = vmatmul.f32.gmra.mxu0 %v1339
    %v1377 = vpop.f32.mrf.mxu0
    %v1378 = vadd.f32 %v1358, %v1377
    %1379 = vdwg.mxu0
    %v1380 = vmax.f32 %v1378, 0.0
    %v1381 = vld [vmem:[%s9] sm:$0xff]
    %v1382 = vld [vmem:[%s9 + $0x8] sm:$0xff]
    %v1383 = vld [vmem:[%s9 + $0x10] sm:$0xff]
    %v1384 = vld [vmem:[%s9 + $0x18] sm:$0xff]
    %v1385 = vld [vmem:[%s9 + $0x20] sm:$0xff]
    %v1386 = vld [vmem:[%s9 + $0x28] sm:$0xff]
    %v1387 = vld [vmem:[%s9 + $0x30] sm:$0xff]
    %v1388 = vld [vmem:[%s9 + $0x38] sm:$0xff]
    %v1389 = vld [vmem:[%s9 + $0x40] sm:$0xff]
    %v1390 = vld [vmem:[%s9 + $0x48] sm:$0xff]
    %v1391 = vld [vmem:[%s9 + $0x50] sm:$0xff]
    %v1392 = vld [vmem:[%s9 + $0x58] sm:$0xff]
    %v1393 = vld [vmem:[%s9 + $0x60] sm:$0xff]
    %v1394 = vld [vmem:[%s9 + $0x68] sm:$0xff]
    %v1395 = vld [vmem:[%s9 + $0x70] sm:$0xff]
    %v1396 = vld [vmem:[%s9 + $0x78] sm:$0xff]
    %v1397 = vld [vmem:[%s10] sm:$0x1]
    %v1399 = vperm.slane %v1397, 0
    %1401 = vmatpush.msra.mxu0 %v1396
    %1402 = vmatpush.msra.mxu0 %v1395
    %1403 = vmatpush.msra.mxu0 %v1394
    %1404 = vmatpush.msra.mxu0 %v1393
    %1405 = vmatpush.msra.mxu0 %v1392
    %1406 = vmatpush.msra.mxu0 %v1391
    %1407 = vmatpush.msra.mxu0 %v1390
    %1408 = vmatpush.msra.mxu0 %v1389
    %1409 = vmatpush.msra.mxu0 %v1388
    %1410 = vmatpush.msra.mxu0 %v1387
    %1411 = vmatpush.msra.mxu0 %v1386
    %1412 = vmatpush.msra.mxu0 %v1385
    %1413 = vmatpush.msra.mxu0 %v1384
    %1414 = vmatpush.msra.mxu0 %v1383
    %1415 = vmatpush.msra.mxu0 %v1382
    %1416 = vmatpush.msra.mxu0 %v1381
    %1417 = vmatmul.f32.gmra.mxu0 %v1380
    %v1418 = vpop.f32.mrf.mxu0
    %v1419 = vadd.f32 %v1399, %v1418
    %1420 = vdwg.mxu0
    %vm1421 = vcmask 74752
    %1422 = vst.msk [vmem:[#allocation2] sm:$0x3] %vm1421, %v1419
    // Predicated region
    $region46: #{net_forward.1} parent=1 // pred_check
      _
    $region47: #{net_forward.1} parent=1 // pred_check_branch
      %1424 = sbr.rel (0) target = $region49
    $region48: #{net_forward.1} parent=1 // pred_region
      %1426 = vsyncadd [#allocation3], 0
      %s1428 = sshll.u32 [#allocation2], 4
      %s1429 = int_to_ptr.vmem [resolvable:$true] %s1428
      %s1430 = sshll.u32 %s11, 4
      %s1431 = int_to_ptr.hbm [resolvable:$true] %s1430
      %1433 = dma.vmem_to_hbm [thread:$0]  %s1429, 32, %s1431, [#allocation3]
    $region49: #{net_forward.1} parent=1 // pred_fallthru
      _
    // Predicated region
    $region50: #{net_forward.1} parent=1 // pred_check
      _
    $region51: #{net_forward.1} parent=1 // pred_check_branch
      %1435 = sbr.rel (0) target = $region53
    $region52: #{net_forward.1} parent=1 // pred_region
      %1437 = dma.done [#allocation3], 32
    $region53: #{net_forward.1} parent=1 // pred_fallthru
      _
    %1438 = vsyncpa [#allocation3], 1

</llo_original>
